<compile_context>
chip_gen: v6e
topology: v6e:2x2x1
jax: 0.10.0
libtpu: 0.0.40
codegen_flags: <defaults>
</compile_context>

<pallas_src>
import jax
import jax.numpy as jnp
from jax.experimental import pallas as pl
from jax.experimental.pallas import tpu as pltpu


def _round_up(a, b):
    return ((a + b - 1) // b) * b


# --------------------- fused small-N kernel (pool+MLP+scale) ----------------
def _fused_kernel(x_ref, brow_ref, bcol_ref, invc_ref, w1_ref, b1_ref,
                  w2r_ref, alpha_ref, b2_ref, out_ref):
    x = x_ref[...]                                      # [Np, D] f32
    num_graphs = invc_ref.shape[0]
    n_pad = x.shape[0]

    # segment mean-pool: exact 0/1 one-hot on the MXU (padded ids are -1)
    bids_row = brow_ref[...]                            # [1, Np] int32
    gid = jax.lax.broadcasted_iota(jnp.int32, (num_graphs, n_pad), 0)
    onehot = (bids_row == gid).astype(jnp.float32)      # [G, Np]
    graph_repr = jnp.dot(onehot, x,
                         preferred_element_type=jnp.float32) * invc_ref[...]

    # attention MLP: Linear -> PReLU -> Linear(1) -> Sigmoid
    h = jnp.dot(graph_repr, w1_ref[...],
                preferred_element_type=jnp.float32) + b1_ref[...]      # [G, H]
    alpha = alpha_ref[0, 0]                             # PReLU slope (SMEM)
    h = jnp.where(h >= 0.0, h, alpha * h)
    # 1-output Linear stays on the VPU as a row-dot
    s = jnp.sum(h * w2r_ref[...], axis=1, keepdims=True) + b2_ref[0, 0]
    attn = jax.nn.sigmoid(s)                            # [G, 1]

    # node_attn = attn[batch] via a second (small) one-hot, then scale
    bids_col = bcol_ref[...]                            # [Np, 1] int32
    gid2 = jax.lax.broadcasted_iota(jnp.int32, (n_pad, num_graphs), 1)
    onehot2 = (bids_col == gid2).astype(jnp.float32)    # [Np, G]
    node_attn = jnp.dot(onehot2, attn, preferred_element_type=jnp.float32)
    out_ref[...] = x * node_attn


# --------------------- pass 1 (large N): per-graph feature sums -------------
def _segment_sum_kernel(x_ref, brow_ref, sums_ref, acc_ref):
    # grid = (d_tiles, n_tiles): axis 0 "parallel" (feature split, v7x megacore)
    #                            axis 1 "arbitrary" (node reduction, resident acc)
    @pl.when(pl.program_id(1) == 0)
    def _():
        acc_ref[...] = jnp.zeros_like(acc_ref)

    x = x_ref[...]                                      # [tile_n, d_blk] f32
    bids = brow_ref[...]                                # [1, tile_n] int32
    num_graphs, tile_n = acc_ref.shape[0], x.shape[0]

    gid = jax.lax.broadcasted_iota(jnp.int32, (num_graphs, tile_n), 0)
    onehot = (bids == gid).astype(jnp.float32)          # [G, tile_n] exact 0/1
    acc_ref[...] += jnp.dot(onehot, x, preferred_element_type=jnp.float32)

    @pl.when(pl.program_id(1) == pl.num_programs(1) - 1)
    def _():
        sums_ref[...] = acc_ref[...]


# --------------------- pass 2 (large N): out = x * attn[batch] --------------
def _scale_kernel(x_ref, na_ref, out_ref):
    # node_attn is pre-gathered in the wrapper and streamed as a (tile_n, 1)
    # block -> the kernel is pure HBM streaming (no iota/compare/reduce chain).
    out_ref[...] = x_ref[...] * na_ref[...]


# --------------------- tile sizing -------------------------------------------
def _choose_tile_n(D, G, requested):
    # (a) one-hot vreg pressure: keep G_padded * tile_n <= ~128K elements
    g_pad = max(8, _round_up(G, 8))
    cap_onehot = max(128, (131072 // g_pad) // 128 * 128)
    # (b) VMEM budget: double-buffered x + out tiles (pass 2) <= ~16 MiB
    cap_vmem = max(128, ((16 * 1024 * 1024) // (16 * max(D, 1))) // 128 * 128)
    tn = min(requested, cap_onehot, cap_vmem)
    return max(128, (tn // 128) * 128)


# --------------------- wrapper -----------------------------------------------
def dynamic_attention(x, batch, params, num_graphs, tile_n=2048,
                      use_fast_path=None, vmem_limit_bytes=32 * 1024 * 1024):
    """x: [N, D] float32, batch: [N] int graph id per node in [0, num_graphs)."""
    N, D = x.shape
    H = params["w1"].shape[1]
    G = int(num_graphs)

    batch_i32 = batch.astype(jnp.int32)
    # 1/counts in plain JAX (removes the in-kernel XLU sum + divide)
    counts = jnp.zeros((G,), jnp.float32).at[batch_i32].add(1.0)
    inv_counts = (1.0 / jnp.maximum(counts, 1.0)).reshape(G, 1)
    w2_row = params["w2"].reshape(1, H)                  # [1, H] for VPU row-dot

    # ---------------- small-N fused fast path ----------------
    n_pad_fast = _round_up(max(N, 128), 128)
    fast_bytes = 4 * (2 * n_pad_fast * D + 2 * n_pad_fast * G + G * D + D * H)
    fits_fast = fast_bytes <= 12 * 1024 * 1024
    use_fast = fits_fast if use_fast_path is None else (bool(use_fast_path)
                                                        and fits_fast)

    if use_fast:
        pad = n_pad_fast - N
        x_p = jnp.pad(x, ((0, pad), (0, 0))) if pad else x
        b_p = (jnp.pad(batch_i32, (0, pad), constant_values=-1)
               if pad else batch_i32)                    # -1 matches no graph
        batch_row = b_p.reshape(1, n_pad_fast)
        batch_col = b_p.reshape(n_pad_fast, 1)

        out_p = pl.pallas_call(
            _fused_kernel,
            out_shape=jax.ShapeDtypeStruct((n_pad_fast, D), jnp.float32),
            grid=(1,),
            in_specs=[
                pl.BlockSpec((n_pad_fast, D), lambda i: (0, 0)),     # x
                pl.BlockSpec((1, n_pad_fast), lambda i: (0, 0)),     # batch row
                pl.BlockSpec((n_pad_fast, 1), lambda i: (0, 0)),     # batch col
                pl.BlockSpec((G, 1), lambda i: (0, 0)),              # 1/counts
                pl.BlockSpec((D, H), lambda i: (0, 0)),              # w1
                pl.BlockSpec((1, H), lambda i: (0, 0)),              # b1
                pl.BlockSpec((1, H), lambda i: (0, 0)),              # w2 row
                pl.BlockSpec(memory_space=pltpu.MemorySpace.SMEM),   # alpha
                pl.BlockSpec(memory_space=pltpu.MemorySpace.SMEM),   # b2
            ],
            out_specs=pl.BlockSpec((n_pad_fast, D), lambda i: (0, 0)),
            compiler_params=pltpu.CompilerParams(
                dimension_semantics=("arbitrary",),
                vmem_limit_bytes=vmem_limit_bytes),
        )(x_p, batch_row, batch_col, inv_counts, params["w1"], params["b1"],
          w2_row, params["alpha"], params["b2"])
        return out_p[:N] if pad else out_p

    # ---------------- tiled large-N path ----------------
    tn = _choose_tile_n(D, G, tile_n)
    n_pad = _round_up(N, tn)
    n_tiles = n_pad // tn
    pad = n_pad - N
    x_p = jnp.pad(x, ((0, pad), (0, 0))) if pad else x
    b_p = (jnp.pad(batch_i32, (0, pad), constant_values=-1)
           if pad else batch_i32)
    batch_row = b_p.reshape(1, n_pad)

    # feature split so both v7x TensorCores stream x (no-op on v5e/v6e)
    d_blk = D // 2 if (D >= 256 and D % 256 == 0) else D
    d_tiles = D // d_blk

    # pass 1: per-graph feature sums
    sums = pl.pallas_call(
        _segment_sum_kernel,
        out_shape=jax.ShapeDtypeStruct((G, D), jnp.float32),
        grid=(d_tiles, n_tiles),
        in_specs=[
            pl.BlockSpec((tn, d_blk), lambda j, i: (i, j)),   # x tile
            pl.BlockSpec((1, tn), lambda j, i: (0, i)),       # batch ids (row)
        ],
        out_specs=pl.BlockSpec((G, d_blk), lambda j, i: (0, j)),
        scratch_shapes=[pltpu.VMEM((G, d_blk), jnp.float32)],
        compiler_params=pltpu.CompilerParams(
            dimension_semantics=("parallel", "arbitrary"),
            vmem_limit_bytes=vmem_limit_bytes),
    )(x_p, batch_row)

    # tiny per-graph MLP + attn[batch] gather in plain JAX (microseconds)
    with jax.default_matmul_precision("highest"):
        graph_repr = sums * inv_counts                        # [G, D]
        h = graph_repr @ params["w1"] + params["b1"]          # [G, H]
        h = jnp.where(h >= 0.0, h, params["alpha"][0, 0] * h)
        attn = jax.nn.sigmoid(h @ params["w2"] + params["b2"])  # [G, 1]
    node_attn = attn[batch_i32]                               # [N, 1]
    node_attn_p = (jnp.pad(node_attn, ((0, pad), (0, 0)))
                   if pad else node_attn)

    # pass 2: pure streaming scale (megacore-parallel over node tiles)
    out_p = pl.pallas_call(
        _scale_kernel,
        out_shape=jax.ShapeDtypeStruct((n_pad, D), jnp.float32),
        grid=(n_tiles,),
        in_specs=[
            pl.BlockSpec((tn, D), lambda i: (i, 0)),          # x tile
            pl.BlockSpec((tn, 1), lambda i: (i, 0)),          # attn[batch] tile
        ],
        out_specs=pl.BlockSpec((tn, D), lambda i: (i, 0)),
        compiler_params=pltpu.CompilerParams(
            dimension_semantics=("parallel",),
            vmem_limit_bytes=vmem_limit_bytes),
    )(x_p, node_attn_p)

    return out_p[:N] if pad else out_p


# --------------------- params / reference / demo -----------------------------
def init_params(key, in_dim):
    hidden = in_dim // 2
    k1, k2, k3, k4 = jax.random.split(key, 4)
    return {
        "w1": jax.random.normal(k1, (in_dim, hidden), jnp.float32) * 0.1,
        "b1": jax.random.normal(k2, (1, hidden), jnp.float32) * 0.01,
        "alpha": jnp.full((1, 1), 0.25, jnp.float32),    # nn.PReLU() default
        "w2": jax.random.normal(k3, (hidden, 1), jnp.float32) * 0.1,
        "b2": jax.random.normal(k4, (1, 1), jnp.float32) * 0.01,
    }


def _reference(x, batch, params, num_graphs):
    # Pure-JAX reference (full f32 matmuls to mirror PyTorch numerics).
    with jax.default_matmul_precision("highest"):
        oh = (batch[None, :] == jnp.arange(num_graphs)[:, None]).astype(jnp.float32)
        mean = (oh @ x) / jnp.maximum(oh.sum(1, keepdims=True), 1.0)
        h = mean @ params["w1"] + params["b1"]
        h = jnp.where(h >= 0, h, params["alpha"][0, 0] * h)
        s = jax.nn.sigmoid(h @ params["w2"] + params["b2"])
        return x * s[batch]


if __name__ == "__main__":
    key = jax.random.PRNGKey(0)
    kx, kb, kp = jax.random.split(key, 3)

    # N=500 deliberately not a tile multiple -> exercises padding
    N, in_dim, num_graphs = 500, 128, 3
    x = jax.random.normal(kx, (N, in_dim), jnp.float32)
    batch = jnp.sort(jax.random.randint(kb, (N,), 0, num_graphs, jnp.int32))
    params = init_params(kp, in_dim)
    ref = _reference(x, batch, params, num_graphs)

    # 1) small-N fused fast path (auto-selected at this size)
    out_fast = jax.block_until_ready(
        dynamic_attention(x, batch, params, num_graphs))
    assert out_fast.shape == ref.shape
    assert jnp.allclose(out_fast, ref, atol=1e-5, rtol=1e-5), (
        float(jnp.max(jnp.abs(out_fast - ref))))

    # 2) tiled large-N path (forced, small tile -> multi-step grid + padding)
    out_tiled = jax.block_until_ready(
        dynamic_attention(x, batch, params, num_graphs,
                          use_fast_path=False, tile_n=256))
    assert jnp.allclose(out_tiled, ref, atol=1e-5, rtol=1e-5), (
        float(jnp.max(jnp.abs(out_tiled - ref))))

    print("KERNEL_OK")
</pallas_src>

<mosaic_0001>
module attributes {stable_mosaic.version = 11 : i64} {
  func.func @_fused_kernel(%arg0: i32, %arg1: memref<512x128xf32, #tpu.memory_space<vmem>>, %arg2: memref<1x512xi32, #tpu.memory_space<vmem>>, %arg3: memref<512x1xi32, #tpu.memory_space<vmem>>, %arg4: memref<3x1xf32, #tpu.memory_space<vmem>>, %arg5: memref<128x64xf32, #tpu.memory_space<vmem>>, %arg6: memref<1x64xf32, #tpu.memory_space<vmem>>, %arg7: memref<1x64xf32, #tpu.memory_space<vmem>>, %arg8: memref<1x1xf32, #tpu.memory_space<smem>>, %arg9: memref<1x1xf32, #tpu.memory_space<smem>>, %arg10: memref<512x128xf32, #tpu.memory_space<vmem>>) attributes {dimension_semantics = [#tpu.dimension_semantics<arbitrary>], iteration_bounds = array<i64: 1>, scalar_prefetch = 0 : i64, scratch_operands = 0 : i64, tpu.core_type = #tpu.core_type<tc>, window_params = [{pipeline_mode = #tpu.pipeline_mode<synchronous>, transform_indices = @transform_0, window_bounds = array<i64: 512, 128>}, {pipeline_mode = #tpu.pipeline_mode<synchronous>, transform_indices = @transform_1, window_bounds = array<i64: 1, 512>}, {pipeline_mode = #tpu.pipeline_mode<synchronous>, transform_indices = @transform_2, window_bounds = array<i64: 512, 1>}, {pipeline_mode = #tpu.pipeline_mode<synchronous>, transform_indices = @transform_3, window_bounds = array<i64: 3, 1>}, {pipeline_mode = #tpu.pipeline_mode<synchronous>, transform_indices = @transform_4, window_bounds = array<i64: 128, 64>}, {pipeline_mode = #tpu.pipeline_mode<synchronous>, transform_indices = @transform_5, window_bounds = array<i64: 1, 64>}, {pipeline_mode = #tpu.pipeline_mode<synchronous>, transform_indices = @transform_6, window_bounds = array<i64: 1, 64>}, {transform_indices = @transform_7, window_bounds = array<i64: 1, 1>}, {transform_indices = @transform_8, window_bounds = array<i64: 1, 1>}, {pipeline_mode = #tpu.pipeline_mode<synchronous>, transform_indices = @transform_9, window_bounds = array<i64: 512, 128>}]} {
    %c0 = arith.constant 0 : index
    %c0_0 = arith.constant 0 : index
    %0 = vector.load %arg1[%c0, %c0_0] : memref<512x128xf32, #tpu.memory_space<vmem>>, vector<512x128xf32>
    %c0_1 = arith.constant 0 : index
    %c0_2 = arith.constant 0 : index
    %1 = vector.load %arg2[%c0_1, %c0_2] : memref<1x512xi32, #tpu.memory_space<vmem>>, vector<1x512xi32>
    %2 = tpu.iota {dimensions = array<i32: 0>} : vector<3x512xi32>
    %3 = vector.broadcast %1 : vector<1x512xi32> to vector<3x512xi32>
    %4 = arith.cmpi eq, %3, %2 : vector<3x512xi32>
    %5 = arith.extui %4 : vector<3x512xi1> to vector<3x512xi32>
    %6 = arith.sitofp %5 : vector<3x512xi32> to vector<3x512xf32>
    %cst = arith.constant dense<0.000000e+00> : vector<3x128xf32>
    %7 = tpu.matmul %6, %0, %cst {dimension_numbers = #tpu.dot_dimension_numbers<[1], [0], [0], [1], [0, 0, 1, 1], [], []>} : vector<3x512xf32>, vector<512x128xf32>, vector<3x128xf32> -> vector<3x128xf32>
    %c0_3 = arith.constant 0 : index
    %c0_4 = arith.constant 0 : index
    %8 = vector.load %arg4[%c0_3, %c0_4] : memref<3x1xf32, #tpu.memory_space<vmem>>, vector<3x1xf32>
    %9 = vector.broadcast %8 : vector<3x1xf32> to vector<3x128xf32>
    %10 = arith.mulf %7, %9 : vector<3x128xf32>
    %c0_5 = arith.constant 0 : index
    %c0_6 = arith.constant 0 : index
    %11 = vector.load %arg5[%c0_5, %c0_6] : memref<128x64xf32, #tpu.memory_space<vmem>>, vector<128x64xf32>
    %cst_7 = arith.constant dense<0.000000e+00> : vector<3x64xf32>
    %12 = tpu.matmul %10, %11, %cst_7 {dimension_numbers = #tpu.dot_dimension_numbers<[1], [0], [0], [1], [0, 0, 1, 1], [], []>} : vector<3x128xf32>, vector<128x64xf32>, vector<3x64xf32> -> vector<3x64xf32>
    %c0_8 = arith.constant 0 : index
    %c0_9 = arith.constant 0 : index
    %13 = vector.load %arg6[%c0_8, %c0_9] : memref<1x64xf32, #tpu.memory_space<vmem>>, vector<1x64xf32>
    %14 = vector.broadcast %13 : vector<1x64xf32> to vector<3x64xf32>
    %15 = arith.addf %12, %14 : vector<3x64xf32>
    %c0_10 = arith.constant 0 : index
    %c0_11 = arith.constant 0 : index
    %16 = memref.load %arg8[%c0_10, %c0_11] : memref<1x1xf32, #tpu.memory_space<smem>>
    %cst_12 = arith.constant 0.000000e+00 : f32
    %17 = vector.broadcast %cst_12 : f32 to vector<3x64xf32>
    %18 = arith.cmpf oge, %15, %17 : vector<3x64xf32>
    %19 = vector.broadcast %16 : f32 to vector<3x64xf32>
    %20 = arith.mulf %19, %15 : vector<3x64xf32>
    %21 = arith.select %18, %15, %20 : vector<3x64xi1>, vector<3x64xf32>
    %c0_13 = arith.constant 0 : index
    %c0_14 = arith.constant 0 : index
    %22 = vector.load %arg7[%c0_13, %c0_14] : memref<1x64xf32, #tpu.memory_space<vmem>>, vector<1x64xf32>
    %23 = vector.broadcast %22 : vector<1x64xf32> to vector<3x64xf32>
    %24 = arith.mulf %21, %23 : vector<3x64xf32>
    %cst_15 = arith.constant dense<0.000000e+00> : vector<3xf32>
    %25 = vector.multi_reduction <add>, %24, %cst_15 [1] : vector<3x64xf32> to vector<3xf32>
    %26 = vector.shape_cast %25 : vector<3xf32> to vector<3x1xf32>
    %c0_16 = arith.constant 0 : index
    %c0_17 = arith.constant 0 : index
    %27 = memref.load %arg9[%c0_16, %c0_17] : memref<1x1xf32, #tpu.memory_space<smem>>
    %28 = vector.broadcast %27 : f32 to vector<3x1xf32>
    %29 = arith.addf %26, %28 : vector<3x1xf32>
    %30 = arith.negf %29 : vector<3x1xf32>
    %31 = math.exp %30 : vector<3x1xf32>
    %cst_18 = arith.constant 1.000000e+00 : f32
    %32 = vector.broadcast %cst_18 : f32 to vector<3x1xf32>
    %33 = arith.addf %32, %31 : vector<3x1xf32>
    %34 = arith.divf %32, %33 : vector<3x1xf32>
    %c0_19 = arith.constant 0 : index
    %c0_20 = arith.constant 0 : index
    %35 = vector.load %arg3[%c0_19, %c0_20] : memref<512x1xi32, #tpu.memory_space<vmem>>, vector<512x1xi32>
    %36 = tpu.iota {dimensions = array<i32: 1>} : vector<512x3xi32>
    %37 = vector.broadcast %35 : vector<512x1xi32> to vector<512x3xi32>
    %38 = arith.cmpi eq, %37, %36 : vector<512x3xi32>
    %39 = arith.extui %38 : vector<512x3xi1> to vector<512x3xi32>
    %40 = arith.sitofp %39 : vector<512x3xi32> to vector<512x3xf32>
    %cst_21 = arith.constant dense<0.000000e+00> : vector<512x1xf32>
    %41 = tpu.matmul %40, %34, %cst_21 {dimension_numbers = #tpu.dot_dimension_numbers<[1], [0], [0], [1], [0, 0, 1, 1], [], []>} : vector<512x3xf32>, vector<3x1xf32>, vector<512x1xf32> -> vector<512x1xf32>
    %42 = vector.broadcast %41 : vector<512x1xf32> to vector<512x128xf32>
    %43 = arith.mulf %0, %42 : vector<512x128xf32>
    %c0_22 = arith.constant 0 : index
    %c0_23 = arith.constant 0 : index
    %44 = vector.load %arg10[%c0_22, %c0_23] : memref<512x128xf32, #tpu.memory_space<vmem>>, vector<512x128xf32>
    tpu.vector_store %arg10[%c0_22, %c0_23], %43 {strides = array<i32>} : memref<512x128xf32, #tpu.memory_space<vmem>>, vector<512x128xf32>,
    return
  }
  func.func @transform_0(%arg0: i32) -> (i32, i32) {
    %c0_i32 = arith.constant 0 : i32
    %c0_i32_0 = arith.constant 0 : i32
    %c0_i32_1 = arith.constant 0 : i32
    return %c0_i32, %c0_i32_0 : i32, i32
  }
  func.func @transform_1(%arg0: i32) -> (i32, i32) {
    %c0_i32 = arith.constant 0 : i32
    %c0_i32_0 = arith.constant 0 : i32
    %c0_i32_1 = arith.constant 0 : i32
    return %c0_i32, %c0_i32_0 : i32, i32
  }
  func.func @transform_2(%arg0: i32) -> (i32, i32) {
    %c0_i32 = arith.constant 0 : i32
    %c0_i32_0 = arith.constant 0 : i32
    %c0_i32_1 = arith.constant 0 : i32
    return %c0_i32, %c0_i32_0 : i32, i32
  }
  func.func @transform_3(%arg0: i32) -> (i32, i32) {
    %c0_i32 = arith.constant 0 : i32
    %c0_i32_0 = arith.constant 0 : i32
    %c0_i32_1 = arith.constant 0 : i32
    return %c0_i32, %c0_i32_0 : i32, i32
  }
  func.func @transform_4(%arg0: i32) -> (i32, i32) {
    %c0_i32 = arith.constant 0 : i32
    %c0_i32_0 = arith.constant 0 : i32
    %c0_i32_1 = arith.constant 0 : i32
    return %c0_i32, %c0_i32_0 : i32, i32
  }
  func.func @transform_5(%arg0: i32) -> (i32, i32) {
    %c0_i32 = arith.constant 0 : i32
    %c0_i32_0 = arith.constant 0 : i32
    %c0_i32_1 = arith.constant 0 : i32
    return %c0_i32, %c0_i32_0 : i32, i32
  }
  func.func @transform_6(%arg0: i32) -> (i32, i32) {
    %c0_i32 = arith.constant 0 : i32
    %c0_i32_0 = arith.constant 0 : i32
    %c0_i32_1 = arith.constant 0 : i32
    return %c0_i32, %c0_i32_0 : i32, i32
  }
  func.func @transform_7(%arg0: i32) -> (i32, i32) {
    %c0_i32 = arith.constant 0 : i32
    %c0_i32_0 = arith.constant 0 : i32
    %c0_i32_1 = arith.constant 0 : i32
    return %c0_i32, %c0_i32_0 : i32, i32
  }
  func.func @transform_8(%arg0: i32) -> (i32, i32) {
    %c0_i32 = arith.constant 0 : i32
    %c0_i32_0 = arith.constant 0 : i32
    %c0_i32_1 = arith.constant 0 : i32
    return %c0_i32, %c0_i32_0 : i32, i32
  }
  func.func @transform_9(%arg0: i32) -> (i32, i32) {
    %c0_i32 = arith.constant 0 : i32
    %c0_i32_0 = arith.constant 0 : i32
    %c0_i32_1 = arith.constant 0 : i32
    return %c0_i32, %c0_i32_0 : i32, i32
  }
}

</mosaic_0001>

<llo_original>
// kernel: tpu_custom_call.1
$region0: #{tpu_custom_call.1}
  #allocation0 [shape = 'u32[]', space=smem, size = 0x4, offset = 0x4, fixed_abs, tag = 'smem constant byte address 0x4 - core index']
  #allocation1 [shape = 'u32[144,128]{1,0:T(1,128)}', space=vmem, size = 0x12000, scoped, tag = 'internal scratch']
  #allocation2 [shape = 'f32[1,1]{1,0:T(1,128)S(6)}', space=smem, size = 0x200, scoped, tag = 'scoped memory for tpu_custom_call.1']
  #allocation3 [shape = 'f32[1,1]{1,0:T(1,128)S(6)}', space=smem, size = 0x200, scoped, tag = 'scoped memory for tpu_custom_call.1']
  %s0 = inlined_call_operand.vmem [shape: f32[512,128], index: 0, kind: input, shape index: {}]
  %s1 = inlined_call_operand.vmem [shape: s32[1,512], index: 1, kind: input, shape index: {}]
  %s2 = inlined_call_operand.vmem [shape: s32[512,1], index: 2, kind: input, shape index: {}]
  %s3 = inlined_call_operand.vmem [shape: f32[3,1], index: 3, kind: input, shape index: {}]
  %s4 = inlined_call_operand.vmem [shape: f32[128,64], index: 4, kind: input, shape index: {}]
  %s5 = inlined_call_operand.vmem [shape: f32[1,64], index: 5, kind: input, shape index: {}]
  %s6 = inlined_call_operand.vmem [shape: f32[1,64], index: 6, kind: input, shape index: {}]
  %s7 = inlined_call_operand.<no memory space> [shape: f32[1,1], index: 7, kind: input, shape index: {}]
  %s8 = inlined_call_operand.<no memory space> [shape: f32[1,1], index: 8, kind: input, shape index: {}]
  %s9 = inlined_call_operand.hbm [shape: f32[512,128], index: 9, kind: output, shape index: {}]
  %s10 = sld [smem:[#allocation0]]
  $region46: #{tpu_custom_call.1} parent=0
    _
  %s12 = ssub.s32 1, %s10
  %s13 = scalar_select 0, %s12, %s10
  %14 = sst [smem:[#allocation2]] %s7
  %15 = sst [smem:[#allocation3]] %s8
  $region1: #{tpu_custom_call.1} parent=0
    #allocation4 [shape = 'u8[262144]{0}', space=vmem, size = 0x40000, scoped, tag = 'output window, operand 0, single buffered']
    #allocation5 [shape = 's32[1]{0}', space=sflag, size = 0x4, scoped, tag = 'scoped memory for tpu_custom_call.1']
    %16 = vsyncpa [#allocation5], 0
    // Predicated region
    $region2: #{tpu_custom_call.1} parent=1 // pred_check
      _
    $region3: #{tpu_custom_call.1} parent=1 // pred_check_branch
      %18 = sbr.rel (0) target = $region5
    $region4: #{tpu_custom_call.1} parent=1 // pred_region
      _
    $region5: #{tpu_custom_call.1} parent=1 // pred_fallthru
      _
    // Predicated region
    $region6: #{tpu_custom_call.1} parent=1 // pred_check
      _
    $region7: #{tpu_custom_call.1} parent=1 // pred_check_branch
      %20 = sbr.rel (0) target = $region9
    $region8: #{tpu_custom_call.1} parent=1 // pred_region
      _
    $region9: #{tpu_custom_call.1} parent=1 // pred_fallthru
      _
    // Predicated region
    $region10: #{tpu_custom_call.1} parent=1 // pred_check
      _
    $region11: #{tpu_custom_call.1} parent=1 // pred_check_branch
      %22 = sbr.rel (0) target = $region13
    $region12: #{tpu_custom_call.1} parent=1 // pred_region
      _
    $region13: #{tpu_custom_call.1} parent=1 // pred_fallthru
      _
    // Predicated region
    $region14: #{tpu_custom_call.1} parent=1 // pred_check
      _
    $region15: #{tpu_custom_call.1} parent=1 // pred_check_branch
      %24 = sbr.rel (0) target = $region17
    $region16: #{tpu_custom_call.1} parent=1 // pred_region
      _
    $region17: #{tpu_custom_call.1} parent=1 // pred_fallthru
      _
    // Predicated region
    $region18: #{tpu_custom_call.1} parent=1 // pred_check
      _
    $region19: #{tpu_custom_call.1} parent=1 // pred_check_branch
      %26 = sbr.rel (0) target = $region21
    $region20: #{tpu_custom_call.1} parent=1 // pred_region
      _
    $region21: #{tpu_custom_call.1} parent=1 // pred_fallthru
      _
    // Predicated region
    $region22: #{tpu_custom_call.1} parent=1 // pred_check
      _
    $region23: #{tpu_custom_call.1} parent=1 // pred_check_branch
      %28 = sbr.rel (0) target = $region25
    $region24: #{tpu_custom_call.1} parent=1 // pred_region
      _
    $region25: #{tpu_custom_call.1} parent=1 // pred_fallthru
      _
    // Predicated region
    $region26: #{tpu_custom_call.1} parent=1 // pred_check
      _
    $region27: #{tpu_custom_call.1} parent=1 // pred_check_branch
      %30 = sbr.rel (0) target = $region29
    $region28: #{tpu_custom_call.1} parent=1 // pred_region
      _
    $region29: #{tpu_custom_call.1} parent=1 // pred_fallthru
      _
    // Predicated region
    $region30: #{tpu_custom_call.1} parent=1 // pred_check
      _
    $region31: #{tpu_custom_call.1} parent=1 // pred_check_branch
      %32 = sbr.rel (0) target = $region33
    $region32: #{tpu_custom_call.1} parent=1 // pred_region
      _
    $region33: #{tpu_custom_call.1} parent=1 // pred_fallthru
      _
    // Predicated region
    $region34: #{tpu_custom_call.1} parent=1 // pred_check
      _
    $region35: #{tpu_custom_call.1} parent=1 // pred_check_branch
      %34 = sbr.rel (0) target = $region37
    $region36: #{tpu_custom_call.1} parent=1 // pred_region
      _
    $region37: #{tpu_custom_call.1} parent=1 // pred_fallthru
      _
    %v35 = vld [vmem:[%s0] sm:$0xff]
    %v36 = vld [vmem:[%s0 + $0x8] sm:$0xff]
    %v37 = vld [vmem:[%s0 + $0x10] sm:$0xff]
    %v38 = vld [vmem:[%s0 + $0x18] sm:$0xff]
    %v39 = vld [vmem:[%s0 + $0x20] sm:$0xff]
    %v40 = vld [vmem:[%s0 + $0x28] sm:$0xff]
    %v41 = vld [vmem:[%s0 + $0x30] sm:$0xff]
    %v42 = vld [vmem:[%s0 + $0x38] sm:$0xff]
    %v43 = vld [vmem:[%s0 + $0x40] sm:$0xff]
    %v44 = vld [vmem:[%s0 + $0x48] sm:$0xff]
    %v45 = vld [vmem:[%s0 + $0x50] sm:$0xff]
    %v46 = vld [vmem:[%s0 + $0x58] sm:$0xff]
    %v47 = vld [vmem:[%s0 + $0x60] sm:$0xff]
    %v48 = vld [vmem:[%s0 + $0x68] sm:$0xff]
    %v49 = vld [vmem:[%s0 + $0x70] sm:$0xff]
    %v50 = vld [vmem:[%s0 + $0x78] sm:$0xff]
    %v51 = vld [vmem:[%s0 + $0x80] sm:$0xff]
    %v52 = vld [vmem:[%s0 + $0x88] sm:$0xff]
    %v53 = vld [vmem:[%s0 + $0x90] sm:$0xff]
    %v54 = vld [vmem:[%s0 + $0x98] sm:$0xff]
    %v55 = vld [vmem:[%s0 + $0xa0] sm:$0xff]
    %v56 = vld [vmem:[%s0 + $0xa8] sm:$0xff]
    %v57 = vld [vmem:[%s0 + $0xb0] sm:$0xff]
    %v58 = vld [vmem:[%s0 + $0xb8] sm:$0xff]
    %v59 = vld [vmem:[%s0 + $0xc0] sm:$0xff]
    %v60 = vld [vmem:[%s0 + $0xc8] sm:$0xff]
    %v61 = vld [vmem:[%s0 + $0xd0] sm:$0xff]
    %v62 = vld [vmem:[%s0 + $0xd8] sm:$0xff]
    %v63 = vld [vmem:[%s0 + $0xe0] sm:$0xff]
    %v64 = vld [vmem:[%s0 + $0xe8] sm:$0xff]
    %v65 = vld [vmem:[%s0 + $0xf0] sm:$0xff]
    %v66 = vld [vmem:[%s0 + $0xf8] sm:$0xff]
    %v67 = vld [vmem:[%s0 + $0x100] sm:$0xff]
    %v68 = vld [vmem:[%s0 + $0x108] sm:$0xff]
    %v69 = vld [vmem:[%s0 + $0x110] sm:$0xff]
    %v70 = vld [vmem:[%s0 + $0x118] sm:$0xff]
    %v71 = vld [vmem:[%s0 + $0x120] sm:$0xff]
    %v72 = vld [vmem:[%s0 + $0x128] sm:$0xff]
    %v73 = vld [vmem:[%s0 + $0x130] sm:$0xff]
    %v74 = vld [vmem:[%s0 + $0x138] sm:$0xff]
    %v75 = vld [vmem:[%s0 + $0x140] sm:$0xff]
    %v76 = vld [vmem:[%s0 + $0x148] sm:$0xff]
    %v77 = vld [vmem:[%s0 + $0x150] sm:$0xff]
    %v78 = vld [vmem:[%s0 + $0x158] sm:$0xff]
    %v79 = vld [vmem:[%s0 + $0x160] sm:$0xff]
    %v80 = vld [vmem:[%s0 + $0x168] sm:$0xff]
    %v81 = vld [vmem:[%s0 + $0x170] sm:$0xff]
    %v82 = vld [vmem:[%s0 + $0x178] sm:$0xff]
    %v83 = vld [vmem:[%s0 + $0x180] sm:$0xff]
    %v84 = vld [vmem:[%s0 + $0x188] sm:$0xff]
    %v85 = vld [vmem:[%s0 + $0x190] sm:$0xff]
    %v86 = vld [vmem:[%s0 + $0x198] sm:$0xff]
    %v87 = vld [vmem:[%s0 + $0x1a0] sm:$0xff]
    %v88 = vld [vmem:[%s0 + $0x1a8] sm:$0xff]
    %v89 = vld [vmem:[%s0 + $0x1b0] sm:$0xff]
    %v90 = vld [vmem:[%s0 + $0x1b8] sm:$0xff]
    %v91 = vld [vmem:[%s0 + $0x1c0] sm:$0xff]
    %v92 = vld [vmem:[%s0 + $0x1c8] sm:$0xff]
    %v93 = vld [vmem:[%s0 + $0x1d0] sm:$0xff]
    %v94 = vld [vmem:[%s0 + $0x1d8] sm:$0xff]
    %v95 = vld [vmem:[%s0 + $0x1e0] sm:$0xff]
    %v96 = vld [vmem:[%s0 + $0x1e8] sm:$0xff]
    %v97 = vld [vmem:[%s0 + $0x1f0] sm:$0xff]
    %v98 = vld [vmem:[%s0 + $0x1f8] sm:$0xff]
    %v99 = vld [vmem:[%s1] sm:$0xf]
    %v100 = vlaneseq
    %v101 = vshrl.u32 %v100, 7
    %v102 = vlaneseq
    %v103 = vshrl.u32 %v102, 7
    %v104 = vsub.s32 0, %v103
    %v105 = vrot.slane %v99, %v104
    %v106 = vlaneseq
    %v107 = vshrl.u32 %v106, 7
    %v108 = vsub.s32 1, %v107
    %v109 = vrot.slane %v99, %v108
    %v110 = vlaneseq
    %v111 = vshrl.u32 %v110, 7
    %v112 = vsub.s32 2, %v111
    %v113 = vrot.slane %v99, %v112
    %v114 = vlaneseq
    %v115 = vshrl.u32 %v114, 7
    %v116 = vsub.s32 3, %v115
    %v117 = vrot.slane %v99, %v116
    %vm118 = vcmp.eq.s32.totalorder %v105, %v101
    %vm119 = vcmp.eq.s32.totalorder %v109, %v101
    %vm120 = vcmp.eq.s32.totalorder %v113, %v101
    %vm121 = vcmp.eq.s32.totalorder %v117, %v101
    %v122 = vsel %vm118, 1, 0
    %v123 = vsel %vm119, 1, 0
    %v124 = vsel %vm120, 1, 0
    %v125 = vsel %vm121, 1, 0
    %v126 = vcvt.s32.f32 %v122
    %v127 = vcvt.s32.f32 %v123
    %v128 = vcvt.s32.f32 %v124
    %v129 = vcvt.s32.f32 %v125
    %130 = vmatprep.subr.mxu0 0.0
    %131 = vmatpush1.msra.mxu0 %v50
    %132 = vmatprep.subr.mxu0 0.0
    %133 = vmatpush1.msra.mxu0 %v49
    %134 = vmatprep.subr.mxu0 0.0
    %135 = vmatpush1.msra.mxu0 %v48
    %136 = vmatprep.subr.mxu0 0.0
    %137 = vmatpush1.msra.mxu0 %v47
    %138 = vmatprep.subr.mxu0 0.0
    %139 = vmatpush1.msra.mxu0 %v46
    %140 = vmatprep.subr.mxu0 0.0
    %141 = vmatpush1.msra.mxu0 %v45
    %142 = vmatprep.subr.mxu0 0.0
    %143 = vmatpush1.msra.mxu0 %v44
    %144 = vmatprep.subr.mxu0 0.0
    %145 = vmatpush1.msra.mxu0 %v43
    %146 = vmatprep.subr.mxu0 0.0
    %147 = vmatpush1.msra.mxu0 %v42
    %148 = vmatprep.subr.mxu0 0.0
    %149 = vmatpush1.msra.mxu0 %v41
    %150 = vmatprep.subr.mxu0 0.0
    %151 = vmatpush1.msra.mxu0 %v40
    %152 = vmatprep.subr.mxu0 0.0
    %153 = vmatpush1.msra.mxu0 %v39
    %154 = vmatprep.subr.mxu0 0.0
    %155 = vmatpush1.msra.mxu0 %v38
    %156 = vmatprep.subr.mxu0 0.0
    %157 = vmatpush1.msra.mxu0 %v37
    %158 = vmatprep.subr.mxu0 0.0
    %159 = vmatpush1.msra.mxu0 %v36
    %160 = vmatprep.subr.mxu0 0.0
    %161 = vmatpush1.msra.mxu0 %v35
    %162 = vmatprep.subr.mxu0 0.0
    %163 = vmatpush2.msra.mxu0 %v66
    %164 = vmatprep.subr.mxu0 0.0
    %165 = vmatpush2.msra.mxu0 %v65
    %166 = vmatprep.subr.mxu0 0.0
    %167 = vmatpush2.msra.mxu0 %v64
    %168 = vmatprep.subr.mxu0 0.0
    %169 = vmatpush2.msra.mxu0 %v63
    %170 = vmatprep.subr.mxu0 0.0
    %171 = vmatpush2.msra.mxu0 %v62
    %172 = vmatprep.subr.mxu0 0.0
    %173 = vmatpush2.msra.mxu0 %v61
    %174 = vmatprep.subr.mxu0 0.0
    %175 = vmatpush2.msra.mxu0 %v60
    %176 = vmatprep.subr.mxu0 0.0
    %177 = vmatpush2.msra.mxu0 %v59
    %178 = vmatprep.subr.mxu0 0.0
    %179 = vmatpush2.msra.mxu0 %v58
    %180 = vmatprep.subr.mxu0 0.0
    %181 = vmatpush2.msra.mxu0 %v57
    %182 = vmatprep.subr.mxu0 0.0
    %183 = vmatpush2.msra.mxu0 %v56
    %184 = vmatprep.subr.mxu0 0.0
    %185 = vmatpush2.msra.mxu0 %v55
    %186 = vmatprep.subr.mxu0 0.0
    %187 = vmatpush2.msra.mxu0 %v54
    %188 = vmatprep.subr.mxu0 0.0
    %189 = vmatpush2.msra.mxu0 %v53
    %190 = vmatprep.subr.mxu0 0.0
    %191 = vmatpush2.msra.mxu0 %v52
    %192 = vmatprep.subr.mxu0 0.0
    %193 = vmatpush2.msra.mxu0 %v51
    %194 = vmatprep.mubr.f32.mxu0 %v127
    %195 = vmatmul.mubr.f32.gmra.mxu0 %v126
    %v196 = vpop.f32.mrf.mxu0
    %v197 = vadd.f32 0.0, %v196
    %v198 = vpop.f32.mrf.mxu0
    %199 = vdwg.mxu0
    %200 = vmatprep.subr.mxu0 0.0
    %201 = vmatpush1.msra.mxu0 %v82
    %202 = vmatprep.subr.mxu0 0.0
    %203 = vmatpush1.msra.mxu0 %v81
    %204 = vmatprep.subr.mxu0 0.0
    %205 = vmatpush1.msra.mxu0 %v80
    %206 = vmatprep.subr.mxu0 0.0
    %207 = vmatpush1.msra.mxu0 %v79
    %208 = vmatprep.subr.mxu0 0.0
    %209 = vmatpush1.msra.mxu0 %v78
    %210 = vmatprep.subr.mxu0 0.0
    %211 = vmatpush1.msra.mxu0 %v77
    %212 = vmatprep.subr.mxu0 0.0
    %213 = vmatpush1.msra.mxu0 %v76
    %214 = vmatprep.subr.mxu0 0.0
    %215 = vmatpush1.msra.mxu0 %v75
    %216 = vmatprep.subr.mxu0 0.0
    %217 = vmatpush1.msra.mxu0 %v74
    %218 = vmatprep.subr.mxu0 0.0
    %219 = vmatpush1.msra.mxu0 %v73
    %220 = vmatprep.subr.mxu0 0.0
    %221 = vmatpush1.msra.mxu0 %v72
    %222 = vmatprep.subr.mxu0 0.0
    %223 = vmatpush1.msra.mxu0 %v71
    %224 = vmatprep.subr.mxu0 0.0
    %225 = vmatpush1.msra.mxu0 %v70
    %226 = vmatprep.subr.mxu0 0.0
    %227 = vmatpush1.msra.mxu0 %v69
    %228 = vmatprep.subr.mxu0 0.0
    %229 = vmatpush1.msra.mxu0 %v68
    %230 = vmatprep.subr.mxu0 0.0
    %231 = vmatpush1.msra.mxu0 %v67
    %232 = vmatprep.subr.mxu0 0.0
    %233 = vmatpush2.msra.mxu0 %v98
    %234 = vmatprep.subr.mxu0 0.0
    %235 = vmatpush2.msra.mxu0 %v97
    %236 = vmatprep.subr.mxu0 0.0
    %237 = vmatpush2.msra.mxu0 %v96
    %238 = vmatprep.subr.mxu0 0.0
    %239 = vmatpush2.msra.mxu0 %v95
    %240 = vmatprep.subr.mxu0 0.0
    %241 = vmatpush2.msra.mxu0 %v94
    %242 = vmatprep.subr.mxu0 0.0
    %243 = vmatpush2.msra.mxu0 %v93
    %244 = vmatprep.subr.mxu0 0.0
    %245 = vmatpush2.msra.mxu0 %v92
    %246 = vmatprep.subr.mxu0 0.0
    %247 = vmatpush2.msra.mxu0 %v91
    %248 = vmatprep.subr.mxu0 0.0
    %249 = vmatpush2.msra.mxu0 %v90
    %250 = vmatprep.subr.mxu0 0.0
    %251 = vmatpush2.msra.mxu0 %v89
    %252 = vmatprep.subr.mxu0 0.0
    %253 = vmatpush2.msra.mxu0 %v88
    %254 = vmatprep.subr.mxu0 0.0
    %255 = vmatpush2.msra.mxu0 %v87
    %256 = vmatprep.subr.mxu0 0.0
    %257 = vmatpush2.msra.mxu0 %v86
    %258 = vmatprep.subr.mxu0 0.0
    %259 = vmatpush2.msra.mxu0 %v85
    %260 = vmatprep.subr.mxu0 0.0
    %261 = vmatpush2.msra.mxu0 %v84
    %262 = vmatprep.subr.mxu0 0.0
    %263 = vmatpush2.msra.mxu0 %v83
    %264 = vmatprep.mubr.f32.mxu0 %v129
    %265 = vmatmul.mubr.f32.gmra.mxu0 %v128
    %v266 = vpop.f32.mrf.mxu0
    %v267 = vadd.f32 %v197, %v266
    %v268 = vpop.f32.mrf.mxu0
    %269 = vdwg.mxu0
    %v270 = vld [vmem:[%s3] sm:$0x7]
    %272 = vset.pattern.permute.xlu0 0
    %273 = vperm.xlu0 %272, %v270
    %v274 = vpop.permute.xlu0 %273
    %v276 = vmul.f32 %v267, %v274
    %v277 = vld [vmem:[%s4] sm:$0xff]
    %v278 = vld [vmem:[%s4 + $0x8] sm:$0xff]
    %v279 = vld [vmem:[%s4 + $0x10] sm:$0xff]
    %v280 = vld [vmem:[%s4 + $0x18] sm:$0xff]
    %v281 = vld [vmem:[%s4 + $0x20] sm:$0xff]
    %v282 = vld [vmem:[%s4 + $0x28] sm:$0xff]
    %v283 = vld [vmem:[%s4 + $0x30] sm:$0xff]
    %v284 = vld [vmem:[%s4 + $0x38] sm:$0xff]
    %v285 = vld [vmem:[%s4 + $0x40] sm:$0xff]
    %v286 = vld [vmem:[%s4 + $0x48] sm:$0xff]
    %v287 = vld [vmem:[%s4 + $0x50] sm:$0xff]
    %v288 = vld [vmem:[%s4 + $0x58] sm:$0xff]
    %v289 = vld [vmem:[%s4 + $0x60] sm:$0xff]
    %v290 = vld [vmem:[%s4 + $0x68] sm:$0xff]
    %v291 = vld [vmem:[%s4 + $0x70] sm:$0xff]
    %v292 = vld [vmem:[%s4 + $0x78] sm:$0xff]
    %v293 = vld [vmem:[%s5] sm:$0x1]
    %v295 = vlaneseq
    %v296 = vshrl.u32 %v295, 7
    %v297 = vsub.s32 0, %v296
    %v298 = vrot.slane %v293, %v297
    %300 = vmatprep.subr.mxu0 0.0
    %301 = vmatpush1.msra.mxu0 %v292
    %302 = vmatprep.subr.mxu0 0.0
    %303 = vmatpush1.msra.mxu0 %v291
    %304 = vmatprep.subr.mxu0 0.0
    %305 = vmatpush1.msra.mxu0 %v290
    %306 = vmatprep.subr.mxu0 0.0
    %307 = vmatpush1.msra.mxu0 %v289
    %308 = vmatprep.subr.mxu0 0.0
    %309 = vmatpush1.msra.mxu0 %v288
    %310 = vmatprep.subr.mxu0 0.0
    %311 = vmatpush1.msra.mxu0 %v287
    %312 = vmatprep.subr.mxu0 0.0
    %313 = vmatpush1.msra.mxu0 %v286
    %314 = vmatprep.subr.mxu0 0.0
    %315 = vmatpush1.msra.mxu0 %v285
    %316 = vmatprep.subr.mxu0 0.0
    %317 = vmatpush1.msra.mxu0 %v284
    %318 = vmatprep.subr.mxu0 0.0
    %319 = vmatpush1.msra.mxu0 %v283
    %320 = vmatprep.subr.mxu0 0.0
    %321 = vmatpush1.msra.mxu0 %v282
    %322 = vmatprep.subr.mxu0 0.0
    %323 = vmatpush1.msra.mxu0 %v281
    %324 = vmatprep.subr.mxu0 0.0
    %325 = vmatpush1.msra.mxu0 %v280
    %326 = vmatprep.subr.mxu0 0.0
    %327 = vmatpush1.msra.mxu0 %v279
    %328 = vmatprep.subr.mxu0 0.0
    %329 = vmatpush1.msra.mxu0 %v278
    %330 = vmatprep.subr.mxu0 0.0
    %331 = vmatpush1.msra.mxu0 %v277
    %332 = vmatprep.subr.mxu0 0.0
    %333 = vmatpush2.msra.mxu0 0.0
    %334 = vmatprep.subr.mxu0 0.0
    %335 = vmatpush2.msra.mxu0 0.0
    %336 = vmatprep.subr.mxu0 0.0
    %337 = vmatpush2.msra.mxu0 0.0
    %338 = vmatprep.subr.mxu0 0.0
    %339 = vmatpush2.msra.mxu0 0.0
    %340 = vmatprep.subr.mxu0 0.0
    %341 = vmatpush2.msra.mxu0 0.0
    %342 = vmatprep.subr.mxu0 0.0
    %343 = vmatpush2.msra.mxu0 0.0
    %344 = vmatprep.subr.mxu0 0.0
    %345 = vmatpush2.msra.mxu0 0.0
    %346 = vmatprep.subr.mxu0 0.0
    %347 = vmatpush2.msra.mxu0 0.0
    %348 = vmatprep.subr.mxu0 0.0
    %349 = vmatpush2.msra.mxu0 0.0
    %350 = vmatprep.subr.mxu0 0.0
    %351 = vmatpush2.msra.mxu0 0.0
    %352 = vmatprep.subr.mxu0 0.0
    %353 = vmatpush2.msra.mxu0 0.0
    %354 = vmatprep.subr.mxu0 0.0
    %355 = vmatpush2.msra.mxu0 0.0
    %356 = vmatprep.subr.mxu0 0.0
    %357 = vmatpush2.msra.mxu0 0.0
    %358 = vmatprep.subr.mxu0 0.0
    %359 = vmatpush2.msra.mxu0 0.0
    %360 = vmatprep.subr.mxu0 0.0
    %361 = vmatpush2.msra.mxu0 0.0
    %362 = vmatprep.subr.mxu0 0.0
    %363 = vmatpush2.msra.mxu0 0.0
    %364 = vmatprep.mubr.f32.mxu0 0.0
    %365 = vmatmul.mubr.f32.gmra.mxu0 %v276
    %v366 = vpop.f32.mrf.mxu0
    %v367 = vadd.f32 %v298, %v366
    %v368 = vpop.f32.mrf.mxu0
    %369 = vdwg.mxu0
    %s370 = sld [smem:[#allocation2]]
    %vm371 = vcmp.ge.f32.partialorder %v367, 0.0
    %v372 = vstv %s370
    %v373 = vmul.f32 %v372, %v367
    %v374 = vsel %vm371, %v367, %v373
    %v375 = vld [vmem:[%s6] sm:$0x1]
    %v377 = vlaneseq
    %v378 = vshrl.u32 %v377, 7
    %v379 = vsub.s32 0, %v378
    %v380 = vrot.slane %v375, %v379
    %v382 = vmul.f32 %v374, %v380
    %vm383 = vcmask 518144
    %v384 = vsel %vm383, %v382, 0.0
    %385 = vadd.xlane.f32.xlu0 %v384
    %v386 = vpop.xlane.xlu0 %385
    %s387 = sld [smem:[#allocation3]]
    %v388 = vstv %s387
    %v389 = vadd.f32 %v386, %v388
    %v390 = vxor.u32 %v389, 2147483648
    %v391 = vmul.f32 %v390, 1.442695
    %v392 = vpow.pop %v391
    %v393 = vadd.f32 %v392, 1.0
    %v394 = vrcp.pop %v393
    %v395 = vmul.f32 1.0, %v394
    %v396 = vld [vmem:[%s2] sm:$0xff]
    %v397 = vld [vmem:[%s2 + $0x8] sm:$0xff]
    %v398 = vld [vmem:[%s2 + $0x10] sm:$0xff]
    %v399 = vld [vmem:[%s2 + $0x18] sm:$0xff]
    %v400 = vld [vmem:[%s2 + $0x20] sm:$0xff]
    %v401 = vld [vmem:[%s2 + $0x28] sm:$0xff]
    %v402 = vld [vmem:[%s2 + $0x30] sm:$0xff]
    %v403 = vld [vmem:[%s2 + $0x38] sm:$0xff]
    %v404 = vld [vmem:[%s2 + $0x40] sm:$0xff]
    %v405 = vld [vmem:[%s2 + $0x48] sm:$0xff]
    %v406 = vld [vmem:[%s2 + $0x50] sm:$0xff]
    %v407 = vld [vmem:[%s2 + $0x58] sm:$0xff]
    %v408 = vld [vmem:[%s2 + $0x60] sm:$0xff]
    %v409 = vld [vmem:[%s2 + $0x68] sm:$0xff]
    %v410 = vld [vmem:[%s2 + $0x70] sm:$0xff]
    %v411 = vld [vmem:[%s2 + $0x78] sm:$0xff]
    %v412 = vld [vmem:[%s2 + $0x80] sm:$0xff]
    %v413 = vld [vmem:[%s2 + $0x88] sm:$0xff]
    %v414 = vld [vmem:[%s2 + $0x90] sm:$0xff]
    %v415 = vld [vmem:[%s2 + $0x98] sm:$0xff]
    %v416 = vld [vmem:[%s2 + $0xa0] sm:$0xff]
    %v417 = vld [vmem:[%s2 + $0xa8] sm:$0xff]
    %v418 = vld [vmem:[%s2 + $0xb0] sm:$0xff]
    %v419 = vld [vmem:[%s2 + $0xb8] sm:$0xff]
    %v420 = vld [vmem:[%s2 + $0xc0] sm:$0xff]
    %v421 = vld [vmem:[%s2 + $0xc8] sm:$0xff]
    %v422 = vld [vmem:[%s2 + $0xd0] sm:$0xff]
    %v423 = vld [vmem:[%s2 + $0xd8] sm:$0xff]
    %v424 = vld [vmem:[%s2 + $0xe0] sm:$0xff]
    %v425 = vld [vmem:[%s2 + $0xe8] sm:$0xff]
    %v426 = vld [vmem:[%s2 + $0xf0] sm:$0xff]
    %v427 = vld [vmem:[%s2 + $0xf8] sm:$0xff]
    %v428 = vld [vmem:[%s2 + $0x100] sm:$0xff]
    %v429 = vld [vmem:[%s2 + $0x108] sm:$0xff]
    %v430 = vld [vmem:[%s2 + $0x110] sm:$0xff]
    %v431 = vld [vmem:[%s2 + $0x118] sm:$0xff]
    %v432 = vld [vmem:[%s2 + $0x120] sm:$0xff]
    %v433 = vld [vmem:[%s2 + $0x128] sm:$0xff]
    %v434 = vld [vmem:[%s2 + $0x130] sm:$0xff]
    %v435 = vld [vmem:[%s2 + $0x138] sm:$0xff]
    %v436 = vld [vmem:[%s2 + $0x140] sm:$0xff]
    %v437 = vld [vmem:[%s2 + $0x148] sm:$0xff]
    %v438 = vld [vmem:[%s2 + $0x150] sm:$0xff]
    %v439 = vld [vmem:[%s2 + $0x158] sm:$0xff]
    %v440 = vld [vmem:[%s2 + $0x160] sm:$0xff]
    %v441 = vld [vmem:[%s2 + $0x168] sm:$0xff]
    %v442 = vld [vmem:[%s2 + $0x170] sm:$0xff]
    %v443 = vld [vmem:[%s2 + $0x178] sm:$0xff]
    %v444 = vld [vmem:[%s2 + $0x180] sm:$0xff]
    %v445 = vld [vmem:[%s2 + $0x188] sm:$0xff]
    %v446 = vld [vmem:[%s2 + $0x190] sm:$0xff]
    %v447 = vld [vmem:[%s2 + $0x198] sm:$0xff]
    %v448 = vld [vmem:[%s2 + $0x1a0] sm:$0xff]
    %v449 = vld [vmem:[%s2 + $0x1a8] sm:$0xff]
    %v450 = vld [vmem:[%s2 + $0x1b0] sm:$0xff]
    %v451 = vld [vmem:[%s2 + $0x1b8] sm:$0xff]
    %v452 = vld [vmem:[%s2 + $0x1c0] sm:$0xff]
    %v453 = vld [vmem:[%s2 + $0x1c8] sm:$0xff]
    %v454 = vld [vmem:[%s2 + $0x1d0] sm:$0xff]
    %v455 = vld [vmem:[%s2 + $0x1d8] sm:$0xff]
    %v456 = vld [vmem:[%s2 + $0x1e0] sm:$0xff]
    %v457 = vld [vmem:[%s2 + $0x1e8] sm:$0xff]
    %v458 = vld [vmem:[%s2 + $0x1f0] sm:$0xff]
    %v459 = vld [vmem:[%s2 + $0x1f8] sm:$0xff]
    %v460 = vlaneseq
    %v461 = vand.u32 %v460, 127
    %462 = vset.pattern.permute.xlu0 0
    %463 = vperm.xlu0 %462, %v396
    %v464 = vpop.permute.xlu0 %463
    %465 = vset.pattern.permute.xlu0 0
    %466 = vperm.xlu0 %465, %v397
    %v467 = vpop.permute.xlu0 %466
    %468 = vset.pattern.permute.xlu0 0
    %469 = vperm.xlu0 %468, %v398
    %v470 = vpop.permute.xlu0 %469
    %471 = vset.pattern.permute.xlu0 0
    %472 = vperm.xlu0 %471, %v399
    %v473 = vpop.permute.xlu0 %472
    %474 = vset.pattern.permute.xlu0 0
    %475 = vperm.xlu0 %474, %v400
    %v476 = vpop.permute.xlu0 %475
    %477 = vset.pattern.permute.xlu0 0
    %478 = vperm.xlu0 %477, %v401
    %v479 = vpop.permute.xlu0 %478
    %480 = vset.pattern.permute.xlu0 0
    %481 = vperm.xlu0 %480, %v402
    %v482 = vpop.permute.xlu0 %481
    %483 = vset.pattern.permute.xlu0 0
    %484 = vperm.xlu0 %483, %v403
    %v485 = vpop.permute.xlu0 %484
    %486 = vset.pattern.permute.xlu0 0
    %487 = vperm.xlu0 %486, %v404
    %v488 = vpop.permute.xlu0 %487
    %489 = vset.pattern.permute.xlu0 0
    %490 = vperm.xlu0 %489, %v405
    %v491 = vpop.permute.xlu0 %490
    %492 = vset.pattern.permute.xlu0 0
    %493 = vperm.xlu0 %492, %v406
    %v494 = vpop.permute.xlu0 %493
    %495 = vset.pattern.permute.xlu0 0
    %496 = vperm.xlu0 %495, %v407
    %v497 = vpop.permute.xlu0 %496
    %498 = vset.pattern.permute.xlu0 0
    %499 = vperm.xlu0 %498, %v408
    %v500 = vpop.permute.xlu0 %499
    %501 = vset.pattern.permute.xlu0 0
    %502 = vperm.xlu0 %501, %v409
    %v503 = vpop.permute.xlu0 %502
    %504 = vset.pattern.permute.xlu0 0
    %505 = vperm.xlu0 %504, %v410
    %v506 = vpop.permute.xlu0 %505
    %507 = vset.pattern.permute.xlu0 0
    %508 = vperm.xlu0 %507, %v411
    %v509 = vpop.permute.xlu0 %508
    %510 = vset.pattern.permute.xlu0 0
    %511 = vperm.xlu0 %510, %v412
    %v512 = vpop.permute.xlu0 %511
    %513 = vset.pattern.permute.xlu0 0
    %514 = vperm.xlu0 %513, %v413
    %v515 = vpop.permute.xlu0 %514
    %516 = vset.pattern.permute.xlu0 0
    %517 = vperm.xlu0 %516, %v414
    %v518 = vpop.permute.xlu0 %517
    %519 = vset.pattern.permute.xlu0 0
    %520 = vperm.xlu0 %519, %v415
    %v521 = vpop.permute.xlu0 %520
    %522 = vset.pattern.permute.xlu0 0
    %523 = vperm.xlu0 %522, %v416
    %v524 = vpop.permute.xlu0 %523
    %525 = vset.pattern.permute.xlu0 0
    %526 = vperm.xlu0 %525, %v417
    %v527 = vpop.permute.xlu0 %526
    %528 = vset.pattern.permute.xlu0 0
    %529 = vperm.xlu0 %528, %v418
    %v530 = vpop.permute.xlu0 %529
    %531 = vset.pattern.permute.xlu0 0
    %532 = vperm.xlu0 %531, %v419
    %v533 = vpop.permute.xlu0 %532
    %534 = vset.pattern.permute.xlu0 0
    %535 = vperm.xlu0 %534, %v420
    %v536 = vpop.permute.xlu0 %535
    %537 = vset.pattern.permute.xlu0 0
    %538 = vperm.xlu0 %537, %v421
    %v539 = vpop.permute.xlu0 %538
    %540 = vset.pattern.permute.xlu0 0
    %541 = vperm.xlu0 %540, %v422
    %v542 = vpop.permute.xlu0 %541
    %543 = vset.pattern.permute.xlu0 0
    %544 = vperm.xlu0 %543, %v423
    %v545 = vpop.permute.xlu0 %544
    %546 = vset.pattern.permute.xlu0 0
    %547 = vperm.xlu0 %546, %v424
    %v548 = vpop.permute.xlu0 %547
    %549 = vset.pattern.permute.xlu0 0
    %550 = vperm.xlu0 %549, %v425
    %v551 = vpop.permute.xlu0 %550
    %552 = vset.pattern.permute.xlu0 0
    %553 = vperm.xlu0 %552, %v426
    %v554 = vpop.permute.xlu0 %553
    %555 = vset.pattern.permute.xlu0 0
    %556 = vperm.xlu0 %555, %v427
    %v557 = vpop.permute.xlu0 %556
    %558 = vset.pattern.permute.xlu0 0
    %559 = vperm.xlu0 %558, %v428
    %v560 = vpop.permute.xlu0 %559
    %561 = vset.pattern.permute.xlu0 0
    %562 = vperm.xlu0 %561, %v429
    %v563 = vpop.permute.xlu0 %562
    %564 = vset.pattern.permute.xlu0 0
    %565 = vperm.xlu0 %564, %v430
    %v566 = vpop.permute.xlu0 %565
    %567 = vset.pattern.permute.xlu0 0
    %568 = vperm.xlu0 %567, %v431
    %v569 = vpop.permute.xlu0 %568
    %570 = vset.pattern.permute.xlu0 0
    %571 = vperm.xlu0 %570, %v432
    %v572 = vpop.permute.xlu0 %571
    %573 = vset.pattern.permute.xlu0 0
    %574 = vperm.xlu0 %573, %v433
    %v575 = vpop.permute.xlu0 %574
    %576 = vset.pattern.permute.xlu0 0
    %577 = vperm.xlu0 %576, %v434
    %v578 = vpop.permute.xlu0 %577
    %579 = vset.pattern.permute.xlu0 0
    %580 = vperm.xlu0 %579, %v435
    %v581 = vpop.permute.xlu0 %580
    %582 = vset.pattern.permute.xlu0 0
    %583 = vperm.xlu0 %582, %v436
    %v584 = vpop.permute.xlu0 %583
    %585 = vset.pattern.permute.xlu0 0
    %586 = vperm.xlu0 %585, %v437
    %v587 = vpop.permute.xlu0 %586
    %588 = vset.pattern.permute.xlu0 0
    %589 = vperm.xlu0 %588, %v438
    %v590 = vpop.permute.xlu0 %589
    %591 = vset.pattern.permute.xlu0 0
    %592 = vperm.xlu0 %591, %v439
    %v593 = vpop.permute.xlu0 %592
    %594 = vset.pattern.permute.xlu0 0
    %595 = vperm.xlu0 %594, %v440
    %v596 = vpop.permute.xlu0 %595
    %597 = vset.pattern.permute.xlu0 0
    %598 = vperm.xlu0 %597, %v441
    %v599 = vpop.permute.xlu0 %598
    %600 = vset.pattern.permute.xlu0 0
    %601 = vperm.xlu0 %600, %v442
    %v602 = vpop.permute.xlu0 %601
    %603 = vset.pattern.permute.xlu0 0
    %604 = vperm.xlu0 %603, %v443
    %v605 = vpop.permute.xlu0 %604
    %606 = vset.pattern.permute.xlu0 0
    %607 = vperm.xlu0 %606, %v444
    %v608 = vpop.permute.xlu0 %607
    %609 = vset.pattern.permute.xlu0 0
    %610 = vperm.xlu0 %609, %v445
    %v611 = vpop.permute.xlu0 %610
    %612 = vset.pattern.permute.xlu0 0
    %613 = vperm.xlu0 %612, %v446
    %v614 = vpop.permute.xlu0 %613
    %615 = vset.pattern.permute.xlu0 0
    %616 = vperm.xlu0 %615, %v447
    %v617 = vpop.permute.xlu0 %616
    %618 = vset.pattern.permute.xlu0 0
    %619 = vperm.xlu0 %618, %v448
    %v620 = vpop.permute.xlu0 %619
    %621 = vset.pattern.permute.xlu0 0
    %622 = vperm.xlu0 %621, %v449
    %v623 = vpop.permute.xlu0 %622
    %624 = vset.pattern.permute.xlu0 0
    %625 = vperm.xlu0 %624, %v450
    %v626 = vpop.permute.xlu0 %625
    %627 = vset.pattern.permute.xlu0 0
    %628 = vperm.xlu0 %627, %v451
    %v629 = vpop.permute.xlu0 %628
    %630 = vset.pattern.permute.xlu0 0
    %631 = vperm.xlu0 %630, %v452
    %v632 = vpop.permute.xlu0 %631
    %633 = vset.pattern.permute.xlu0 0
    %634 = vperm.xlu0 %633, %v453
    %v635 = vpop.permute.xlu0 %634
    %636 = vset.pattern.permute.xlu0 0
    %637 = vperm.xlu0 %636, %v454
    %v638 = vpop.permute.xlu0 %637
    %639 = vset.pattern.permute.xlu0 0
    %640 = vperm.xlu0 %639, %v455
    %v641 = vpop.permute.xlu0 %640
    %642 = vset.pattern.permute.xlu0 0
    %643 = vperm.xlu0 %642, %v456
    %v644 = vpop.permute.xlu0 %643
    %645 = vset.pattern.permute.xlu0 0
    %646 = vperm.xlu0 %645, %v457
    %v647 = vpop.permute.xlu0 %646
    %648 = vset.pattern.permute.xlu0 0
    %649 = vperm.xlu0 %648, %v458
    %v650 = vpop.permute.xlu0 %649
    %651 = vset.pattern.permute.xlu0 0
    %652 = vperm.xlu0 %651, %v459
    %v653 = vpop.permute.xlu0 %652
    %vm654 = vcmp.eq.s32.totalorder %v464, %v461
    %vm655 = vcmp.eq.s32.totalorder %v467, %v461
    %vm656 = vcmp.eq.s32.totalorder %v470, %v461
    %vm657 = vcmp.eq.s32.totalorder %v473, %v461
    %vm658 = vcmp.eq.s32.totalorder %v476, %v461
    %vm659 = vcmp.eq.s32.totalorder %v479, %v461
    %vm660 = vcmp.eq.s32.totalorder %v482, %v461
    %vm661 = vcmp.eq.s32.totalorder %v485, %v461
    %vm662 = vcmp.eq.s32.totalorder %v488, %v461
    %vm663 = vcmp.eq.s32.totalorder %v491, %v461
    %vm664 = vcmp.eq.s32.totalorder %v494, %v461
    %vm665 = vcmp.eq.s32.totalorder %v497, %v461
    %vm666 = vcmp.eq.s32.totalorder %v500, %v461
    %vm667 = vcmp.eq.s32.totalorder %v503, %v461
    %vm668 = vcmp.eq.s32.totalorder %v506, %v461
    %vm669 = vcmp.eq.s32.totalorder %v509, %v461
    %vm670 = vcmp.eq.s32.totalorder %v512, %v461
    %vm671 = vcmp.eq.s32.totalorder %v515, %v461
    %vm672 = vcmp.eq.s32.totalorder %v518, %v461
    %vm673 = vcmp.eq.s32.totalorder %v521, %v461
    %vm674 = vcmp.eq.s32.totalorder %v524, %v461
    %vm675 = vcmp.eq.s32.totalorder %v527, %v461
    %vm676 = vcmp.eq.s32.totalorder %v530, %v461
    %vm677 = vcmp.eq.s32.totalorder %v533, %v461
    %vm678 = vcmp.eq.s32.totalorder %v536, %v461
    %vm679 = vcmp.eq.s32.totalorder %v539, %v461
    %vm680 = vcmp.eq.s32.totalorder %v542, %v461
    %vm681 = vcmp.eq.s32.totalorder %v545, %v461
    %vm682 = vcmp.eq.s32.totalorder %v548, %v461
    %vm683 = vcmp.eq.s32.totalorder %v551, %v461
    %vm684 = vcmp.eq.s32.totalorder %v554, %v461
    %vm685 = vcmp.eq.s32.totalorder %v557, %v461
    %vm686 = vcmp.eq.s32.totalorder %v560, %v461
    %vm687 = vcmp.eq.s32.totalorder %v563, %v461
    %vm688 = vcmp.eq.s32.totalorder %v566, %v461
    %vm689 = vcmp.eq.s32.totalorder %v569, %v461
    %vm690 = vcmp.eq.s32.totalorder %v572, %v461
    %vm691 = vcmp.eq.s32.totalorder %v575, %v461
    %vm692 = vcmp.eq.s32.totalorder %v578, %v461
    %vm693 = vcmp.eq.s32.totalorder %v581, %v461
    %vm694 = vcmp.eq.s32.totalorder %v584, %v461
    %vm695 = vcmp.eq.s32.totalorder %v587, %v461
    %vm696 = vcmp.eq.s32.totalorder %v590, %v461
    %vm697 = vcmp.eq.s32.totalorder %v593, %v461
    %vm698 = vcmp.eq.s32.totalorder %v596, %v461
    %vm699 = vcmp.eq.s32.totalorder %v599, %v461
    %vm700 = vcmp.eq.s32.totalorder %v602, %v461
    %vm701 = vcmp.eq.s32.totalorder %v605, %v461
    %vm702 = vcmp.eq.s32.totalorder %v608, %v461
    %vm703 = vcmp.eq.s32.totalorder %v611, %v461
    %vm704 = vcmp.eq.s32.totalorder %v614, %v461
    %vm705 = vcmp.eq.s32.totalorder %v617, %v461
    %vm706 = vcmp.eq.s32.totalorder %v620, %v461
    %vm707 = vcmp.eq.s32.totalorder %v623, %v461
    %vm708 = vcmp.eq.s32.totalorder %v626, %v461
    %vm709 = vcmp.eq.s32.totalorder %v629, %v461
    %vm710 = vcmp.eq.s32.totalorder %v632, %v461
    %vm711 = vcmp.eq.s32.totalorder %v635, %v461
    %vm712 = vcmp.eq.s32.totalorder %v638, %v461
    %vm713 = vcmp.eq.s32.totalorder %v641, %v461
    %vm714 = vcmp.eq.s32.totalorder %v644, %v461
    %vm715 = vcmp.eq.s32.totalorder %v647, %v461
    %vm716 = vcmp.eq.s32.totalorder %v650, %v461
    %vm717 = vcmp.eq.s32.totalorder %v653, %v461
    %v718 = vsel %vm654, 1, 0
    %v719 = vsel %vm655, 1, 0
    %v720 = vsel %vm656, 1, 0
    %v721 = vsel %vm657, 1, 0
    %v722 = vsel %vm658, 1, 0
    %v723 = vsel %vm659, 1, 0
    %v724 = vsel %vm660, 1, 0
    %v725 = vsel %vm661, 1, 0
    %v726 = vsel %vm662, 1, 0
    %v727 = vsel %vm663, 1, 0
    %v728 = vsel %vm664, 1, 0
    %v729 = vsel %vm665, 1, 0
    %v730 = vsel %vm666, 1, 0
    %v731 = vsel %vm667, 1, 0
    %v732 = vsel %vm668, 1, 0
    %v733 = vsel %vm669, 1, 0
    %v734 = vsel %vm670, 1, 0
    %v735 = vsel %vm671, 1, 0
    %v736 = vsel %vm672, 1, 0
    %v737 = vsel %vm673, 1, 0
    %v738 = vsel %vm674, 1, 0
    %v739 = vsel %vm675, 1, 0
    %v740 = vsel %vm676, 1, 0
    %v741 = vsel %vm677, 1, 0
    %v742 = vsel %vm678, 1, 0
    %v743 = vsel %vm679, 1, 0
    %v744 = vsel %vm680, 1, 0
    %v745 = vsel %vm681, 1, 0
    %v746 = vsel %vm682, 1, 0
    %v747 = vsel %vm683, 1, 0
    %v748 = vsel %vm684, 1, 0
    %v749 = vsel %vm685, 1, 0
    %v750 = vsel %vm686, 1, 0
    %v751 = vsel %vm687, 1, 0
    %v752 = vsel %vm688, 1, 0
    %v753 = vsel %vm689, 1, 0
    %v754 = vsel %vm690, 1, 0
    %v755 = vsel %vm691, 1, 0
    %v756 = vsel %vm692, 1, 0
    %v757 = vsel %vm693, 1, 0
    %v758 = vsel %vm694, 1, 0
    %v759 = vsel %vm695, 1, 0
    %v760 = vsel %vm696, 1, 0
    %v761 = vsel %vm697, 1, 0
    %v762 = vsel %vm698, 1, 0
    %v763 = vsel %vm699, 1, 0
    %v764 = vsel %vm700, 1, 0
    %v765 = vsel %vm701, 1, 0
    %v766 = vsel %vm702, 1, 0
    %v767 = vsel %vm703, 1, 0
    %v768 = vsel %vm704, 1, 0
    %v769 = vsel %vm705, 1, 0
    %v770 = vsel %vm706, 1, 0
    %v771 = vsel %vm707, 1, 0
    %v772 = vsel %vm708, 1, 0
    %v773 = vsel %vm709, 1, 0
    %v774 = vsel %vm710, 1, 0
    %v775 = vsel %vm711, 1, 0
    %v776 = vsel %vm712, 1, 0
    %v777 = vsel %vm713, 1, 0
    %v778 = vsel %vm714, 1, 0
    %v779 = vsel %vm715, 1, 0
    %v780 = vsel %vm716, 1, 0
    %v781 = vsel %vm717, 1, 0
    %v782 = vcvt.s32.f32 %v718
    %v783 = vcvt.s32.f32 %v719
    %v784 = vcvt.s32.f32 %v720
    %v785 = vcvt.s32.f32 %v721
    %v786 = vcvt.s32.f32 %v722
    %v787 = vcvt.s32.f32 %v723
    %v788 = vcvt.s32.f32 %v724
    %v789 = vcvt.s32.f32 %v725
    %v790 = vcvt.s32.f32 %v726
    %v791 = vcvt.s32.f32 %v727
    %v792 = vcvt.s32.f32 %v728
    %v793 = vcvt.s32.f32 %v729
    %v794 = vcvt.s32.f32 %v730
    %v795 = vcvt.s32.f32 %v731
    %v796 = vcvt.s32.f32 %v732
    %v797 = vcvt.s32.f32 %v733
    %v798 = vcvt.s32.f32 %v734
    %v799 = vcvt.s32.f32 %v735
    %v800 = vcvt.s32.f32 %v736
    %v801 = vcvt.s32.f32 %v737
    %v802 = vcvt.s32.f32 %v738
    %v803 = vcvt.s32.f32 %v739
    %v804 = vcvt.s32.f32 %v740
    %v805 = vcvt.s32.f32 %v741
    %v806 = vcvt.s32.f32 %v742
    %v807 = vcvt.s32.f32 %v743
    %v808 = vcvt.s32.f32 %v744
    %v809 = vcvt.s32.f32 %v745
    %v810 = vcvt.s32.f32 %v746
    %v811 = vcvt.s32.f32 %v747
    %v812 = vcvt.s32.f32 %v748
    %v813 = vcvt.s32.f32 %v749
    %v814 = vcvt.s32.f32 %v750
    %v815 = vcvt.s32.f32 %v751
    %v816 = vcvt.s32.f32 %v752
    %v817 = vcvt.s32.f32 %v753
    %v818 = vcvt.s32.f32 %v754
    %v819 = vcvt.s32.f32 %v755
    %v820 = vcvt.s32.f32 %v756
    %v821 = vcvt.s32.f32 %v757
    %v822 = vcvt.s32.f32 %v758
    %v823 = vcvt.s32.f32 %v759
    %v824 = vcvt.s32.f32 %v760
    %v825 = vcvt.s32.f32 %v761
    %v826 = vcvt.s32.f32 %v762
    %v827 = vcvt.s32.f32 %v763
    %v828 = vcvt.s32.f32 %v764
    %v829 = vcvt.s32.f32 %v765
    %v830 = vcvt.s32.f32 %v766
    %v831 = vcvt.s32.f32 %v767
    %v832 = vcvt.s32.f32 %v768
    %v833 = vcvt.s32.f32 %v769
    %v834 = vcvt.s32.f32 %v770
    %v835 = vcvt.s32.f32 %v771
    %v836 = vcvt.s32.f32 %v772
    %v837 = vcvt.s32.f32 %v773
    %v838 = vcvt.s32.f32 %v774
    %v839 = vcvt.s32.f32 %v775
    %v840 = vcvt.s32.f32 %v776
    %v841 = vcvt.s32.f32 %v777
    %v842 = vcvt.s32.f32 %v778
    %v843 = vcvt.s32.f32 %v779
    %v844 = vcvt.s32.f32 %v780
    %v845 = vcvt.s32.f32 %v781
    %vm846 = vcmask 23552
    %v848 = vsel %vm846, %v782, 0
    %v851 = vsel %vm846, %v783, 0
    %v854 = vsel %vm846, %v784, 0
    %v857 = vsel %vm846, %v785, 0
    %v860 = vsel %vm846, %v786, 0
    %v863 = vsel %vm846, %v787, 0
    %v866 = vsel %vm846, %v788, 0
    %v869 = vsel %vm846, %v789, 0
    %v872 = vsel %vm846, %v790, 0
    %v875 = vsel %vm846, %v791, 0
    %v878 = vsel %vm846, %v792, 0
    %v881 = vsel %vm846, %v793, 0
    %v884 = vsel %vm846, %v794, 0
    %v887 = vsel %vm846, %v795, 0
    %v890 = vsel %vm846, %v796, 0
    %v893 = vsel %vm846, %v797, 0
    %v896 = vsel %vm846, %v798, 0
    %v899 = vsel %vm846, %v799, 0
    %v902 = vsel %vm846, %v800, 0
    %v905 = vsel %vm846, %v801, 0
    %v908 = vsel %vm846, %v802, 0
    %v911 = vsel %vm846, %v803, 0
    %v914 = vsel %vm846, %v804, 0
    %v917 = vsel %vm846, %v805, 0
    %v920 = vsel %vm846, %v806, 0
    %v923 = vsel %vm846, %v807, 0
    %v926 = vsel %vm846, %v808, 0
    %v929 = vsel %vm846, %v809, 0
    %v932 = vsel %vm846, %v810, 0
    %v935 = vsel %vm846, %v811, 0
    %v938 = vsel %vm846, %v812, 0
    %v941 = vsel %vm846, %v813, 0
    %v944 = vsel %vm846, %v814, 0
    %v947 = vsel %vm846, %v815, 0
    %v950 = vsel %vm846, %v816, 0
    %v953 = vsel %vm846, %v817, 0
    %v956 = vsel %vm846, %v818, 0
    %v959 = vsel %vm846, %v819, 0
    %v962 = vsel %vm846, %v820, 0
    %v965 = vsel %vm846, %v821, 0
    %v968 = vsel %vm846, %v822, 0
    %v971 = vsel %vm846, %v823, 0
    %v974 = vsel %vm846, %v824, 0
    %v977 = vsel %vm846, %v825, 0
    %v980 = vsel %vm846, %v826, 0
    %v983 = vsel %vm846, %v827, 0
    %v986 = vsel %vm846, %v828, 0
    %v989 = vsel %vm846, %v829, 0
    %v992 = vsel %vm846, %v830, 0
    %v995 = vsel %vm846, %v831, 0
    %v998 = vsel %vm846, %v832, 0
    %v1001 = vsel %vm846, %v833, 0
    %v1004 = vsel %vm846, %v834, 0
    %v1007 = vsel %vm846, %v835, 0
    %v1010 = vsel %vm846, %v836, 0
    %v1013 = vsel %vm846, %v837, 0
    %v1016 = vsel %vm846, %v838, 0
    %v1019 = vsel %vm846, %v839, 0
    %v1022 = vsel %vm846, %v840, 0
    %v1025 = vsel %vm846, %v841, 0
    %v1028 = vsel %vm846, %v842, 0
    %v1031 = vsel %vm846, %v843, 0
    %v1034 = vsel %vm846, %v844, 0
    %v1037 = vsel %vm846, %v845, 0
    %vm1039 = vcmask 1042432
    %v1041 = vsel %vm1039, %v395, 0
    %1043 = vmatprep.subr.mxu0 0.0
    %1044 = vmatpush1.msra.mxu0 0.0
    %1045 = vmatprep.subr.mxu0 0.0
    %1046 = vmatpush1.msra.mxu0 0.0
    %1047 = vmatprep.subr.mxu0 0.0
    %1048 = vmatpush1.msra.mxu0 0.0
    %1049 = vmatprep.subr.mxu0 0.0
    %1050 = vmatpush1.msra.mxu0 0.0
    %1051 = vmatprep.subr.mxu0 0.0
    %1052 = vmatpush1.msra.mxu0 0.0
    %1053 = vmatprep.subr.mxu0 0.0
    %1054 = vmatpush1.msra.mxu0 0.0
    %1055 = vmatprep.subr.mxu0 0.0
    %1056 = vmatpush1.msra.mxu0 0.0
    %1057 = vmatprep.subr.mxu0 0.0
    %1058 = vmatpush1.msra.mxu0 0.0
    %1059 = vmatprep.subr.mxu0 0.0
    %1060 = vmatpush1.msra.mxu0 0.0
    %1061 = vmatprep.subr.mxu0 0.0
    %1062 = vmatpush1.msra.mxu0 0.0
    %1063 = vmatprep.subr.mxu0 0.0
    %1064 = vmatpush1.msra.mxu0 0.0
    %1065 = vmatprep.subr.mxu0 0.0
    %1066 = vmatpush1.msra.mxu0 0.0
    %1067 = vmatprep.subr.mxu0 0.0
    %1068 = vmatpush1.msra.mxu0 0.0
    %1069 = vmatprep.subr.mxu0 0.0
    %1070 = vmatpush1.msra.mxu0 0.0
    %1071 = vmatprep.subr.mxu0 0.0
    %1072 = vmatpush1.msra.mxu0 0.0
    %1073 = vmatprep.subr.mxu0 0.0
    %1074 = vmatpush1.msra.mxu0 %v1041
    %1075 = vmatprep.subr.mxu0 0.0
    %1076 = vmatpush2.msra.mxu0 0.0
    %1077 = vmatprep.subr.mxu0 0.0
    %1078 = vmatpush2.msra.mxu0 0.0
    %1079 = vmatprep.subr.mxu0 0.0
    %1080 = vmatpush2.msra.mxu0 0.0
    %1081 = vmatprep.subr.mxu0 0.0
    %1082 = vmatpush2.msra.mxu0 0.0
    %1083 = vmatprep.subr.mxu0 0.0
    %1084 = vmatpush2.msra.mxu0 0.0
    %1085 = vmatprep.subr.mxu0 0.0
    %1086 = vmatpush2.msra.mxu0 0.0
    %1087 = vmatprep.subr.mxu0 0.0
    %1088 = vmatpush2.msra.mxu0 0.0
    %1089 = vmatprep.subr.mxu0 0.0
    %1090 = vmatpush2.msra.mxu0 0.0
    %1091 = vmatprep.subr.mxu0 0.0
    %1092 = vmatpush2.msra.mxu0 0.0
    %1093 = vmatprep.subr.mxu0 0.0
    %1094 = vmatpush2.msra.mxu0 0.0
    %1095 = vmatprep.subr.mxu0 0.0
    %1096 = vmatpush2.msra.mxu0 0.0
    %1097 = vmatprep.subr.mxu0 0.0
    %1098 = vmatpush2.msra.mxu0 0.0
    %1099 = vmatprep.subr.mxu0 0.0
    %1100 = vmatpush2.msra.mxu0 0.0
    %1101 = vmatprep.subr.mxu0 0.0
    %1102 = vmatpush2.msra.mxu0 0.0
    %1103 = vmatprep.subr.mxu0 0.0
    %1104 = vmatpush2.msra.mxu0 0.0
    %1105 = vmatprep.subr.mxu0 0.0
    %1106 = vmatpush2.msra.mxu0 0.0
    %1107 = vmatprep.mubr.f32.mxu0 0.0
    %1108 = vmatmul.mubr.f32.gmra.mxu0 %v848
    %v1109 = vpop.f32.mrf.mxu0
    %v1110 = vadd.f32 0.0, %v1109
    %v1111 = vpop.f32.mrf.mxu0
    %1112 = vmatprep.mubr.f32.mxu0 0.0
    %1113 = vmatmul.mubr.f32.gmra.mxu0 %v851
    %v1114 = vpop.f32.mrf.mxu0
    %v1115 = vadd.f32 0.0, %v1114
    %v1116 = vpop.f32.mrf.mxu0
    %1117 = vmatprep.mubr.f32.mxu0 0.0
    %1118 = vmatmul.mubr.f32.gmra.mxu0 %v854
    %v1119 = vpop.f32.mrf.mxu0
    %v1120 = vadd.f32 0.0, %v1119
    %v1121 = vpop.f32.mrf.mxu0
    %1122 = vmatprep.mubr.f32.mxu0 0.0
    %1123 = vmatmul.mubr.f32.gmra.mxu0 %v857
    %v1124 = vpop.f32.mrf.mxu0
    %v1125 = vadd.f32 0.0, %v1124
    %v1126 = vpop.f32.mrf.mxu0
    %1127 = vmatprep.mubr.f32.mxu0 0.0
    %1128 = vmatmul.mubr.f32.gmra.mxu0 %v860
    %v1129 = vpop.f32.mrf.mxu0
    %v1130 = vadd.f32 0.0, %v1129
    %v1131 = vpop.f32.mrf.mxu0
    %1132 = vmatprep.mubr.f32.mxu0 0.0
    %1133 = vmatmul.mubr.f32.gmra.mxu0 %v863
    %v1134 = vpop.f32.mrf.mxu0
    %v1135 = vadd.f32 0.0, %v1134
    %v1136 = vpop.f32.mrf.mxu0
    %1137 = vmatprep.mubr.f32.mxu0 0.0
    %1138 = vmatmul.mubr.f32.gmra.mxu0 %v866
    %v1139 = vpop.f32.mrf.mxu0
    %v1140 = vadd.f32 0.0, %v1139
    %v1141 = vpop.f32.mrf.mxu0
    %1142 = vmatprep.mubr.f32.mxu0 0.0
    %1143 = vmatmul.mubr.f32.gmra.mxu0 %v869
    %v1144 = vpop.f32.mrf.mxu0
    %v1145 = vadd.f32 0.0, %v1144
    %v1146 = vpop.f32.mrf.mxu0
    %1147 = vmatprep.mubr.f32.mxu0 0.0
    %1148 = vmatmul.mubr.f32.gmra.mxu0 %v872
    %v1149 = vpop.f32.mrf.mxu0
    %v1150 = vadd.f32 0.0, %v1149
    %v1151 = vpop.f32.mrf.mxu0
    %1152 = vmatprep.mubr.f32.mxu0 0.0
    %1153 = vmatmul.mubr.f32.gmra.mxu0 %v875
    %v1154 = vpop.f32.mrf.mxu0
    %v1155 = vadd.f32 0.0, %v1154
    %v1156 = vpop.f32.mrf.mxu0
    %1157 = vmatprep.mubr.f32.mxu0 0.0
    %1158 = vmatmul.mubr.f32.gmra.mxu0 %v878
    %v1159 = vpop.f32.mrf.mxu0
    %v1160 = vadd.f32 0.0, %v1159
    %v1161 = vpop.f32.mrf.mxu0
    %1162 = vmatprep.mubr.f32.mxu0 0.0
    %1163 = vmatmul.mubr.f32.gmra.mxu0 %v881
    %v1164 = vpop.f32.mrf.mxu0
    %v1165 = vadd.f32 0.0, %v1164
    %v1166 = vpop.f32.mrf.mxu0
    %1167 = vmatprep.mubr.f32.mxu0 0.0
    %1168 = vmatmul.mubr.f32.gmra.mxu0 %v884
    %v1169 = vpop.f32.mrf.mxu0
    %v1170 = vadd.f32 0.0, %v1169
    %v1171 = vpop.f32.mrf.mxu0
    %1172 = vmatprep.mubr.f32.mxu0 0.0
    %1173 = vmatmul.mubr.f32.gmra.mxu0 %v887
    %v1174 = vpop.f32.mrf.mxu0
    %v1175 = vadd.f32 0.0, %v1174
    %v1176 = vpop.f32.mrf.mxu0
    %1177 = vmatprep.mubr.f32.mxu0 0.0
    %1178 = vmatmul.mubr.f32.gmra.mxu0 %v890
    %v1179 = vpop.f32.mrf.mxu0
    %v1180 = vadd.f32 0.0, %v1179
    %v1181 = vpop.f32.mrf.mxu0
    %1182 = vmatprep.mubr.f32.mxu0 0.0
    %1183 = vmatmul.mubr.f32.gmra.mxu0 %v893
    %v1184 = vpop.f32.mrf.mxu0
    %v1185 = vadd.f32 0.0, %v1184
    %v1186 = vpop.f32.mrf.mxu0
    %1187 = vmatprep.mubr.f32.mxu0 0.0
    %1188 = vmatmul.mubr.f32.gmra.mxu0 %v896
    %v1189 = vpop.f32.mrf.mxu0
    %v1190 = vadd.f32 0.0, %v1189
    %v1191 = vpop.f32.mrf.mxu0
    %1192 = vmatprep.mubr.f32.mxu0 0.0
    %1193 = vmatmul.mubr.f32.gmra.mxu0 %v899
    %v1194 = vpop.f32.mrf.mxu0
    %v1195 = vadd.f32 0.0, %v1194
    %v1196 = vpop.f32.mrf.mxu0
    %1197 = vmatprep.mubr.f32.mxu0 0.0
    %1198 = vmatmul.mubr.f32.gmra.mxu0 %v902
    %v1199 = vpop.f32.mrf.mxu0
    %v1200 = vadd.f32 0.0, %v1199
    %v1201 = vpop.f32.mrf.mxu0
    %1202 = vmatprep.mubr.f32.mxu0 0.0
    %1203 = vmatmul.mubr.f32.gmra.mxu0 %v905
    %v1204 = vpop.f32.mrf.mxu0
    %v1205 = vadd.f32 0.0, %v1204
    %v1206 = vpop.f32.mrf.mxu0
    %1207 = vmatprep.mubr.f32.mxu0 0.0
    %1208 = vmatmul.mubr.f32.gmra.mxu0 %v908
    %v1209 = vpop.f32.mrf.mxu0
    %v1210 = vadd.f32 0.0, %v1209
    %v1211 = vpop.f32.mrf.mxu0
    %1212 = vmatprep.mubr.f32.mxu0 0.0
    %1213 = vmatmul.mubr.f32.gmra.mxu0 %v911
    %v1214 = vpop.f32.mrf.mxu0
    %v1215 = vadd.f32 0.0, %v1214
    %v1216 = vpop.f32.mrf.mxu0
    %1217 = vmatprep.mubr.f32.mxu0 0.0
    %1218 = vmatmul.mubr.f32.gmra.mxu0 %v914
    %v1219 = vpop.f32.mrf.mxu0
    %v1220 = vadd.f32 0.0, %v1219
    %v1221 = vpop.f32.mrf.mxu0
    %1222 = vmatprep.mubr.f32.mxu0 0.0
    %1223 = vmatmul.mubr.f32.gmra.mxu0 %v917
    %v1224 = vpop.f32.mrf.mxu0
    %v1225 = vadd.f32 0.0, %v1224
    %v1226 = vpop.f32.mrf.mxu0
    %1227 = vmatprep.mubr.f32.mxu0 0.0
    %1228 = vmatmul.mubr.f32.gmra.mxu0 %v920
    %v1229 = vpop.f32.mrf.mxu0
    %v1230 = vadd.f32 0.0, %v1229
    %v1231 = vpop.f32.mrf.mxu0
    %1232 = vmatprep.mubr.f32.mxu0 0.0
    %1233 = vmatmul.mubr.f32.gmra.mxu0 %v923
    %v1234 = vpop.f32.mrf.mxu0
    %v1235 = vadd.f32 0.0, %v1234
    %v1236 = vpop.f32.mrf.mxu0
    %1237 = vmatprep.mubr.f32.mxu0 0.0
    %1238 = vmatmul.mubr.f32.gmra.mxu0 %v926
    %v1239 = vpop.f32.mrf.mxu0
    %v1240 = vadd.f32 0.0, %v1239
    %v1241 = vpop.f32.mrf.mxu0
    %1242 = vmatprep.mubr.f32.mxu0 0.0
    %1243 = vmatmul.mubr.f32.gmra.mxu0 %v929
    %v1244 = vpop.f32.mrf.mxu0
    %v1245 = vadd.f32 0.0, %v1244
    %v1246 = vpop.f32.mrf.mxu0
    %1247 = vmatprep.mubr.f32.mxu0 0.0
    %1248 = vmatmul.mubr.f32.gmra.mxu0 %v932
    %v1249 = vpop.f32.mrf.mxu0
    %v1250 = vadd.f32 0.0, %v1249
    %v1251 = vpop.f32.mrf.mxu0
    %1252 = vmatprep.mubr.f32.mxu0 0.0
    %1253 = vmatmul.mubr.f32.gmra.mxu0 %v935
    %v1254 = vpop.f32.mrf.mxu0
    %v1255 = vadd.f32 0.0, %v1254
    %v1256 = vpop.f32.mrf.mxu0
    %1257 = vmatprep.mubr.f32.mxu0 0.0
    %1258 = vmatmul.mubr.f32.gmra.mxu0 %v938
    %v1259 = vpop.f32.mrf.mxu0
    %v1260 = vadd.f32 0.0, %v1259
    %v1261 = vpop.f32.mrf.mxu0
    %1262 = vmatprep.mubr.f32.mxu0 0.0
    %1263 = vmatmul.mubr.f32.gmra.mxu0 %v941
    %v1264 = vpop.f32.mrf.mxu0
    %v1265 = vadd.f32 0.0, %v1264
    %v1266 = vpop.f32.mrf.mxu0
    %1267 = vmatprep.mubr.f32.mxu0 0.0
    %1268 = vmatmul.mubr.f32.gmra.mxu0 %v944
    %v1269 = vpop.f32.mrf.mxu0
    %v1270 = vadd.f32 0.0, %v1269
    %v1271 = vpop.f32.mrf.mxu0
    %1272 = vmatprep.mubr.f32.mxu0 0.0
    %1273 = vmatmul.mubr.f32.gmra.mxu0 %v947
    %v1274 = vpop.f32.mrf.mxu0
    %v1275 = vadd.f32 0.0, %v1274
    %v1276 = vpop.f32.mrf.mxu0
    %1277 = vmatprep.mubr.f32.mxu0 0.0
    %1278 = vmatmul.mubr.f32.gmra.mxu0 %v950
    %v1279 = vpop.f32.mrf.mxu0
    %v1280 = vadd.f32 0.0, %v1279
    %v1281 = vpop.f32.mrf.mxu0
    %1282 = vmatprep.mubr.f32.mxu0 0.0
    %1283 = vmatmul.mubr.f32.gmra.mxu0 %v953
    %v1284 = vpop.f32.mrf.mxu0
    %v1285 = vadd.f32 0.0, %v1284
    %v1286 = vpop.f32.mrf.mxu0
    %1287 = vmatprep.mubr.f32.mxu0 0.0
    %1288 = vmatmul.mubr.f32.gmra.mxu0 %v956
    %v1289 = vpop.f32.mrf.mxu0
    %v1290 = vadd.f32 0.0, %v1289
    %v1291 = vpop.f32.mrf.mxu0
    %1292 = vmatprep.mubr.f32.mxu0 0.0
    %1293 = vmatmul.mubr.f32.gmra.mxu0 %v959
    %v1294 = vpop.f32.mrf.mxu0
    %v1295 = vadd.f32 0.0, %v1294
    %v1296 = vpop.f32.mrf.mxu0
    %1297 = vmatprep.mubr.f32.mxu0 0.0
    %1298 = vmatmul.mubr.f32.gmra.mxu0 %v962
    %v1299 = vpop.f32.mrf.mxu0
    %v1300 = vadd.f32 0.0, %v1299
    %v1301 = vpop.f32.mrf.mxu0
    %1302 = vmatprep.mubr.f32.mxu0 0.0
    %1303 = vmatmul.mubr.f32.gmra.mxu0 %v965
    %v1304 = vpop.f32.mrf.mxu0
    %v1305 = vadd.f32 0.0, %v1304
    %v1306 = vpop.f32.mrf.mxu0
    %1307 = vmatprep.mubr.f32.mxu0 0.0
    %1308 = vmatmul.mubr.f32.gmra.mxu0 %v968
    %v1309 = vpop.f32.mrf.mxu0
    %v1310 = vadd.f32 0.0, %v1309
    %v1311 = vpop.f32.mrf.mxu0
    %1312 = vmatprep.mubr.f32.mxu0 0.0
    %1313 = vmatmul.mubr.f32.gmra.mxu0 %v971
    %v1314 = vpop.f32.mrf.mxu0
    %v1315 = vadd.f32 0.0, %v1314
    %v1316 = vpop.f32.mrf.mxu0
    %1317 = vmatprep.mubr.f32.mxu0 0.0
    %1318 = vmatmul.mubr.f32.gmra.mxu0 %v974
    %v1319 = vpop.f32.mrf.mxu0
    %v1320 = vadd.f32 0.0, %v1319
    %v1321 = vpop.f32.mrf.mxu0
    %1322 = vmatprep.mubr.f32.mxu0 0.0
    %1323 = vmatmul.mubr.f32.gmra.mxu0 %v977
    %v1324 = vpop.f32.mrf.mxu0
    %v1325 = vadd.f32 0.0, %v1324
    %v1326 = vpop.f32.mrf.mxu0
    %1327 = vmatprep.mubr.f32.mxu0 0.0
    %1328 = vmatmul.mubr.f32.gmra.mxu0 %v980
    %v1329 = vpop.f32.mrf.mxu0
    %v1330 = vadd.f32 0.0, %v1329
    %v1331 = vpop.f32.mrf.mxu0
    %1332 = vmatprep.mubr.f32.mxu0 0.0
    %1333 = vmatmul.mubr.f32.gmra.mxu0 %v983
    %v1334 = vpop.f32.mrf.mxu0
    %v1335 = vadd.f32 0.0, %v1334
    %v1336 = vpop.f32.mrf.mxu0
    %1337 = vmatprep.mubr.f32.mxu0 0.0
    %1338 = vmatmul.mubr.f32.gmra.mxu0 %v986
    %v1339 = vpop.f32.mrf.mxu0
    %v1340 = vadd.f32 0.0, %v1339
    %v1341 = vpop.f32.mrf.mxu0
    %1342 = vmatprep.mubr.f32.mxu0 0.0
    %1343 = vmatmul.mubr.f32.gmra.mxu0 %v989
    %v1344 = vpop.f32.mrf.mxu0
    %v1345 = vadd.f32 0.0, %v1344
    %v1346 = vpop.f32.mrf.mxu0
    %1347 = vmatprep.mubr.f32.mxu0 0.0
    %1348 = vmatmul.mubr.f32.gmra.mxu0 %v992
    %v1349 = vpop.f32.mrf.mxu0
    %v1350 = vadd.f32 0.0, %v1349
    %v1351 = vpop.f32.mrf.mxu0
    %1352 = vmatprep.mubr.f32.mxu0 0.0
    %1353 = vmatmul.mubr.f32.gmra.mxu0 %v995
    %v1354 = vpop.f32.mrf.mxu0
    %v1355 = vadd.f32 0.0, %v1354
    %v1356 = vpop.f32.mrf.mxu0
    %1357 = vmatprep.mubr.f32.mxu0 0.0
    %1358 = vmatmul.mubr.f32.gmra.mxu0 %v998
    %v1359 = vpop.f32.mrf.mxu0
    %v1360 = vadd.f32 0.0, %v1359
    %v1361 = vpop.f32.mrf.mxu0
    %1362 = vmatprep.mubr.f32.mxu0 0.0
    %1363 = vmatmul.mubr.f32.gmra.mxu0 %v1001
    %v1364 = vpop.f32.mrf.mxu0
    %v1365 = vadd.f32 0.0, %v1364
    %v1366 = vpop.f32.mrf.mxu0
    %1367 = vmatprep.mubr.f32.mxu0 0.0
    %1368 = vmatmul.mubr.f32.gmra.mxu0 %v1004
    %v1369 = vpop.f32.mrf.mxu0
    %v1370 = vadd.f32 0.0, %v1369
    %v1371 = vpop.f32.mrf.mxu0
    %1372 = vmatprep.mubr.f32.mxu0 0.0
    %1373 = vmatmul.mubr.f32.gmra.mxu0 %v1007
    %v1374 = vpop.f32.mrf.mxu0
    %v1375 = vadd.f32 0.0, %v1374
    %v1376 = vpop.f32.mrf.mxu0
    %1377 = vmatprep.mubr.f32.mxu0 0.0
    %1378 = vmatmul.mubr.f32.gmra.mxu0 %v1010
    %v1379 = vpop.f32.mrf.mxu0
    %v1380 = vadd.f32 0.0, %v1379
    %v1381 = vpop.f32.mrf.mxu0
    %1382 = vmatprep.mubr.f32.mxu0 0.0
    %1383 = vmatmul.mubr.f32.gmra.mxu0 %v1013
    %v1384 = vpop.f32.mrf.mxu0
    %v1385 = vadd.f32 0.0, %v1384
    %v1386 = vpop.f32.mrf.mxu0
    %1387 = vmatprep.mubr.f32.mxu0 0.0
    %1388 = vmatmul.mubr.f32.gmra.mxu0 %v1016
    %v1389 = vpop.f32.mrf.mxu0
    %v1390 = vadd.f32 0.0, %v1389
    %v1391 = vpop.f32.mrf.mxu0
    %1392 = vmatprep.mubr.f32.mxu0 0.0
    %1393 = vmatmul.mubr.f32.gmra.mxu0 %v1019
    %v1394 = vpop.f32.mrf.mxu0
    %v1395 = vadd.f32 0.0, %v1394
    %v1396 = vpop.f32.mrf.mxu0
    %1397 = vmatprep.mubr.f32.mxu0 0.0
    %1398 = vmatmul.mubr.f32.gmra.mxu0 %v1022
    %v1399 = vpop.f32.mrf.mxu0
    %v1400 = vadd.f32 0.0, %v1399
    %v1401 = vpop.f32.mrf.mxu0
    %1402 = vmatprep.mubr.f32.mxu0 0.0
    %1403 = vmatmul.mubr.f32.gmra.mxu0 %v1025
    %v1404 = vpop.f32.mrf.mxu0
    %v1405 = vadd.f32 0.0, %v1404
    %v1406 = vpop.f32.mrf.mxu0
    %1407 = vmatprep.mubr.f32.mxu0 0.0
    %1408 = vmatmul.mubr.f32.gmra.mxu0 %v1028
    %v1409 = vpop.f32.mrf.mxu0
    %v1410 = vadd.f32 0.0, %v1409
    %v1411 = vpop.f32.mrf.mxu0
    %1412 = vmatprep.mubr.f32.mxu0 0.0
    %1413 = vmatmul.mubr.f32.gmra.mxu0 %v1031
    %v1414 = vpop.f32.mrf.mxu0
    %v1415 = vadd.f32 0.0, %v1414
    %v1416 = vpop.f32.mrf.mxu0
    %1417 = vmatprep.mubr.f32.mxu0 0.0
    %1418 = vmatmul.mubr.f32.gmra.mxu0 %v1034
    %v1419 = vpop.f32.mrf.mxu0
    %v1420 = vadd.f32 0.0, %v1419
    %v1421 = vpop.f32.mrf.mxu0
    %1422 = vmatprep.mubr.f32.mxu0 0.0
    %1423 = vmatmul.mubr.f32.gmra.mxu0 %v1037
    %v1424 = vpop.f32.mrf.mxu0
    %v1425 = vadd.f32 0.0, %v1424
    %v1426 = vpop.f32.mrf.mxu0
    %1427 = vdwg.mxu0
    %1429 = vset.pattern.permute.xlu0 0
    %1430 = vperm.xlu0 %1429, %v1110
    %v1431 = vpop.permute.xlu0 %1430
    %1434 = vset.pattern.permute.xlu0 0
    %1435 = vperm.xlu0 %1434, %v1115
    %v1436 = vpop.permute.xlu0 %1435
    %1439 = vset.pattern.permute.xlu0 0
    %1440 = vperm.xlu0 %1439, %v1120
    %v1441 = vpop.permute.xlu0 %1440
    %1444 = vset.pattern.permute.xlu0 0
    %1445 = vperm.xlu0 %1444, %v1125
    %v1446 = vpop.permute.xlu0 %1445
    %1449 = vset.pattern.permute.xlu0 0
    %1450 = vperm.xlu0 %1449, %v1130
    %v1451 = vpop.permute.xlu0 %1450
    %1454 = vset.pattern.permute.xlu0 0
    %1455 = vperm.xlu0 %1454, %v1135
    %v1456 = vpop.permute.xlu0 %1455
    %1459 = vset.pattern.permute.xlu0 0
    %1460 = vperm.xlu0 %1459, %v1140
    %v1461 = vpop.permute.xlu0 %1460
    %1464 = vset.pattern.permute.xlu0 0
    %1465 = vperm.xlu0 %1464, %v1145
    %v1466 = vpop.permute.xlu0 %1465
    %1469 = vset.pattern.permute.xlu0 0
    %1470 = vperm.xlu0 %1469, %v1150
    %v1471 = vpop.permute.xlu0 %1470
    %1474 = vset.pattern.permute.xlu0 0
    %1475 = vperm.xlu0 %1474, %v1155
    %v1476 = vpop.permute.xlu0 %1475
    %1479 = vset.pattern.permute.xlu0 0
    %1480 = vperm.xlu0 %1479, %v1160
    %v1481 = vpop.permute.xlu0 %1480
    %1484 = vset.pattern.permute.xlu0 0
    %1485 = vperm.xlu0 %1484, %v1165
    %v1486 = vpop.permute.xlu0 %1485
    %1489 = vset.pattern.permute.xlu0 0
    %1490 = vperm.xlu0 %1489, %v1170
    %v1491 = vpop.permute.xlu0 %1490
    %1494 = vset.pattern.permute.xlu0 0
    %1495 = vperm.xlu0 %1494, %v1175
    %v1496 = vpop.permute.xlu0 %1495
    %1499 = vset.pattern.permute.xlu0 0
    %1500 = vperm.xlu0 %1499, %v1180
    %v1501 = vpop.permute.xlu0 %1500
    %1504 = vset.pattern.permute.xlu0 0
    %1505 = vperm.xlu0 %1504, %v1185
    %v1506 = vpop.permute.xlu0 %1505
    %1509 = vset.pattern.permute.xlu0 0
    %1510 = vperm.xlu0 %1509, %v1190
    %v1511 = vpop.permute.xlu0 %1510
    %1514 = vset.pattern.permute.xlu0 0
    %1515 = vperm.xlu0 %1514, %v1195
    %v1516 = vpop.permute.xlu0 %1515
    %1519 = vset.pattern.permute.xlu0 0
    %1520 = vperm.xlu0 %1519, %v1200
    %v1521 = vpop.permute.xlu0 %1520
    %1524 = vset.pattern.permute.xlu0 0
    %1525 = vperm.xlu0 %1524, %v1205
    %v1526 = vpop.permute.xlu0 %1525
    %1529 = vset.pattern.permute.xlu0 0
    %1530 = vperm.xlu0 %1529, %v1210
    %v1531 = vpop.permute.xlu0 %1530
    %1534 = vset.pattern.permute.xlu0 0
    %1535 = vperm.xlu0 %1534, %v1215
    %v1536 = vpop.permute.xlu0 %1535
    %1539 = vset.pattern.permute.xlu0 0
    %1540 = vperm.xlu0 %1539, %v1220
    %v1541 = vpop.permute.xlu0 %1540
    %1544 = vset.pattern.permute.xlu0 0
    %1545 = vperm.xlu0 %1544, %v1225
    %v1546 = vpop.permute.xlu0 %1545
    %1549 = vset.pattern.permute.xlu0 0
    %1550 = vperm.xlu0 %1549, %v1230
    %v1551 = vpop.permute.xlu0 %1550
    %1554 = vset.pattern.permute.xlu0 0
    %1555 = vperm.xlu0 %1554, %v1235
    %v1556 = vpop.permute.xlu0 %1555
    %1559 = vset.pattern.permute.xlu0 0
    %1560 = vperm.xlu0 %1559, %v1240
    %v1561 = vpop.permute.xlu0 %1560
    %1564 = vset.pattern.permute.xlu0 0
    %1565 = vperm.xlu0 %1564, %v1245
    %v1566 = vpop.permute.xlu0 %1565
    %1569 = vset.pattern.permute.xlu0 0
    %1570 = vperm.xlu0 %1569, %v1250
    %v1571 = vpop.permute.xlu0 %1570
    %1574 = vset.pattern.permute.xlu0 0
    %1575 = vperm.xlu0 %1574, %v1255
    %v1576 = vpop.permute.xlu0 %1575
    %1579 = vset.pattern.permute.xlu0 0
    %1580 = vperm.xlu0 %1579, %v1260
    %v1581 = vpop.permute.xlu0 %1580
    %1584 = vset.pattern.permute.xlu0 0
    %1585 = vperm.xlu0 %1584, %v1265
    %v1586 = vpop.permute.xlu0 %1585
    %1589 = vset.pattern.permute.xlu0 0
    %1590 = vperm.xlu0 %1589, %v1270
    %v1591 = vpop.permute.xlu0 %1590
    %1594 = vset.pattern.permute.xlu0 0
    %1595 = vperm.xlu0 %1594, %v1275
    %v1596 = vpop.permute.xlu0 %1595
    %1599 = vset.pattern.permute.xlu0 0
    %1600 = vperm.xlu0 %1599, %v1280
    %v1601 = vpop.permute.xlu0 %1600
    %1604 = vset.pattern.permute.xlu0 0
    %1605 = vperm.xlu0 %1604, %v1285
    %v1606 = vpop.permute.xlu0 %1605
    %1609 = vset.pattern.permute.xlu0 0
    %1610 = vperm.xlu0 %1609, %v1290
    %v1611 = vpop.permute.xlu0 %1610
    %1614 = vset.pattern.permute.xlu0 0
    %1615 = vperm.xlu0 %1614, %v1295
    %v1616 = vpop.permute.xlu0 %1615
    %1619 = vset.pattern.permute.xlu0 0
    %1620 = vperm.xlu0 %1619, %v1300
    %v1621 = vpop.permute.xlu0 %1620
    %1624 = vset.pattern.permute.xlu0 0
    %1625 = vperm.xlu0 %1624, %v1305
    %v1626 = vpop.permute.xlu0 %1625
    %1629 = vset.pattern.permute.xlu0 0
    %1630 = vperm.xlu0 %1629, %v1310
    %v1631 = vpop.permute.xlu0 %1630
    %1634 = vset.pattern.permute.xlu0 0
    %1635 = vperm.xlu0 %1634, %v1315
    %v1636 = vpop.permute.xlu0 %1635
    %1639 = vset.pattern.permute.xlu0 0
    %1640 = vperm.xlu0 %1639, %v1320
    %v1641 = vpop.permute.xlu0 %1640
    %1644 = vset.pattern.permute.xlu0 0
    %1645 = vperm.xlu0 %1644, %v1325
    %v1646 = vpop.permute.xlu0 %1645
    %1649 = vset.pattern.permute.xlu0 0
    %1650 = vperm.xlu0 %1649, %v1330
    %v1651 = vpop.permute.xlu0 %1650
    %1654 = vset.pattern.permute.xlu0 0
    %1655 = vperm.xlu0 %1654, %v1335
    %v1656 = vpop.permute.xlu0 %1655
    %1659 = vset.pattern.permute.xlu0 0
    %1660 = vperm.xlu0 %1659, %v1340
    %v1661 = vpop.permute.xlu0 %1660
    %1664 = vset.pattern.permute.xlu0 0
    %1665 = vperm.xlu0 %1664, %v1345
    %v1666 = vpop.permute.xlu0 %1665
    %1669 = vset.pattern.permute.xlu0 0
    %1670 = vperm.xlu0 %1669, %v1350
    %v1671 = vpop.permute.xlu0 %1670
    %1674 = vset.pattern.permute.xlu0 0
    %1675 = vperm.xlu0 %1674, %v1355
    %v1676 = vpop.permute.xlu0 %1675
    %1679 = vset.pattern.permute.xlu0 0
    %1680 = vperm.xlu0 %1679, %v1360
    %v1681 = vpop.permute.xlu0 %1680
    %1684 = vset.pattern.permute.xlu0 0
    %1685 = vperm.xlu0 %1684, %v1365
    %v1686 = vpop.permute.xlu0 %1685
    %1689 = vset.pattern.permute.xlu0 0
    %1690 = vperm.xlu0 %1689, %v1370
    %v1691 = vpop.permute.xlu0 %1690
    %1694 = vset.pattern.permute.xlu0 0
    %1695 = vperm.xlu0 %1694, %v1375
    %v1696 = vpop.permute.xlu0 %1695
    %1699 = vset.pattern.permute.xlu0 0
    %1700 = vperm.xlu0 %1699, %v1380
    %v1701 = vpop.permute.xlu0 %1700
    %1704 = vset.pattern.permute.xlu0 0
    %1705 = vperm.xlu0 %1704, %v1385
    %v1706 = vpop.permute.xlu0 %1705
    %1709 = vset.pattern.permute.xlu0 0
    %1710 = vperm.xlu0 %1709, %v1390
    %v1711 = vpop.permute.xlu0 %1710
    %1714 = vset.pattern.permute.xlu0 0
    %1715 = vperm.xlu0 %1714, %v1395
    %v1716 = vpop.permute.xlu0 %1715
    %1719 = vset.pattern.permute.xlu0 0
    %1720 = vperm.xlu0 %1719, %v1400
    %v1721 = vpop.permute.xlu0 %1720
    %1724 = vset.pattern.permute.xlu0 0
    %1725 = vperm.xlu0 %1724, %v1405
    %v1726 = vpop.permute.xlu0 %1725
    %1729 = vset.pattern.permute.xlu0 0
    %1730 = vperm.xlu0 %1729, %v1410
    %v1731 = vpop.permute.xlu0 %1730
    %1734 = vset.pattern.permute.xlu0 0
    %1735 = vperm.xlu0 %1734, %v1415
    %v1736 = vpop.permute.xlu0 %1735
    %1739 = vset.pattern.permute.xlu0 0
    %1740 = vperm.xlu0 %1739, %v1420
    %v1741 = vpop.permute.xlu0 %1740
    %1744 = vset.pattern.permute.xlu0 0
    %1745 = vperm.xlu0 %1744, %v1425
    %v1746 = vpop.permute.xlu0 %1745
    %v1748 = vmul.f32 %v35, %v1431
    %v1749 = vmul.f32 %v36, %v1436
    %v1750 = vmul.f32 %v37, %v1441
    %v1751 = vmul.f32 %v38, %v1446
    %v1752 = vmul.f32 %v39, %v1451
    %v1753 = vmul.f32 %v40, %v1456
    %v1754 = vmul.f32 %v41, %v1461
    %v1755 = vmul.f32 %v42, %v1466
    %v1756 = vmul.f32 %v43, %v1471
    %v1757 = vmul.f32 %v44, %v1476
    %v1758 = vmul.f32 %v45, %v1481
    %v1759 = vmul.f32 %v46, %v1486
    %v1760 = vmul.f32 %v47, %v1491
    %v1761 = vmul.f32 %v48, %v1496
    %v1762 = vmul.f32 %v49, %v1501
    %v1763 = vmul.f32 %v50, %v1506
    %v1764 = vmul.f32 %v51, %v1511
    %v1765 = vmul.f32 %v52, %v1516
    %v1766 = vmul.f32 %v53, %v1521
    %v1767 = vmul.f32 %v54, %v1526
    %v1768 = vmul.f32 %v55, %v1531
    %v1769 = vmul.f32 %v56, %v1536
    %v1770 = vmul.f32 %v57, %v1541
    %v1771 = vmul.f32 %v58, %v1546
    %v1772 = vmul.f32 %v59, %v1551
    %v1773 = vmul.f32 %v60, %v1556
    %v1774 = vmul.f32 %v61, %v1561
    %v1775 = vmul.f32 %v62, %v1566
    %v1776 = vmul.f32 %v63, %v1571
    %v1777 = vmul.f32 %v64, %v1576
    %v1778 = vmul.f32 %v65, %v1581
    %v1779 = vmul.f32 %v66, %v1586
    %v1780 = vmul.f32 %v67, %v1591
    %v1781 = vmul.f32 %v68, %v1596
    %v1782 = vmul.f32 %v69, %v1601
    %v1783 = vmul.f32 %v70, %v1606
    %v1784 = vmul.f32 %v71, %v1611
    %v1785 = vmul.f32 %v72, %v1616
    %v1786 = vmul.f32 %v73, %v1621
    %v1787 = vmul.f32 %v74, %v1626
    %v1788 = vmul.f32 %v75, %v1631
    %v1789 = vmul.f32 %v76, %v1636
    %v1790 = vmul.f32 %v77, %v1641
    %v1791 = vmul.f32 %v78, %v1646
    %v1792 = vmul.f32 %v79, %v1651
    %v1793 = vmul.f32 %v80, %v1656
    %v1794 = vmul.f32 %v81, %v1661
    %v1795 = vmul.f32 %v82, %v1666
    %v1796 = vmul.f32 %v83, %v1671
    %v1797 = vmul.f32 %v84, %v1676
    %v1798 = vmul.f32 %v85, %v1681
    %v1799 = vmul.f32 %v86, %v1686
    %v1800 = vmul.f32 %v87, %v1691
    %v1801 = vmul.f32 %v88, %v1696
    %v1802 = vmul.f32 %v89, %v1701
    %v1803 = vmul.f32 %v90, %v1706
    %v1804 = vmul.f32 %v91, %v1711
    %v1805 = vmul.f32 %v92, %v1716
    %v1806 = vmul.f32 %v93, %v1721
    %v1807 = vmul.f32 %v94, %v1726
    %v1808 = vmul.f32 %v95, %v1731
    %v1809 = vmul.f32 %v96, %v1736
    %v1810 = vmul.f32 %v97, %v1741
    %v1811 = vmul.f32 %v98, %v1746
    %1812 = vst [vmem:[#allocation4] sm:$0xff] %v1748
    %1813 = vst [vmem:[#allocation4 + $0x8] sm:$0xff] %v1749
    %1814 = vst [vmem:[#allocation4 + $0x10] sm:$0xff] %v1750
    %1815 = vst [vmem:[#allocation4 + $0x18] sm:$0xff] %v1751
    %1816 = vst [vmem:[#allocation4 + $0x20] sm:$0xff] %v1752
    %1817 = vst [vmem:[#allocation4 + $0x28] sm:$0xff] %v1753
    %1818 = vst [vmem:[#allocation4 + $0x30] sm:$0xff] %v1754
    %1819 = vst [vmem:[#allocation4 + $0x38] sm:$0xff] %v1755
    %1820 = vst [vmem:[#allocation4 + $0x40] sm:$0xff] %v1756
    %1821 = vst [vmem:[#allocation4 + $0x48] sm:$0xff] %v1757
    %1822 = vst [vmem:[#allocation4 + $0x50] sm:$0xff] %v1758
    %1823 = vst [vmem:[#allocation4 + $0x58] sm:$0xff] %v1759
    %1824 = vst [vmem:[#allocation4 + $0x60] sm:$0xff] %v1760
    %1825 = vst [vmem:[#allocation4 + $0x68] sm:$0xff] %v1761
    %1826 = vst [vmem:[#allocation4 + $0x70] sm:$0xff] %v1762
    %1827 = vst [vmem:[#allocation4 + $0x78] sm:$0xff] %v1763
    %1828 = vst [vmem:[#allocation4 + $0x80] sm:$0xff] %v1764
    %1829 = vst [vmem:[#allocation4 + $0x88] sm:$0xff] %v1765
    %1830 = vst [vmem:[#allocation4 + $0x90] sm:$0xff] %v1766
    %1831 = vst [vmem:[#allocation4 + $0x98] sm:$0xff] %v1767
    %1832 = vst [vmem:[#allocation4 + $0xa0] sm:$0xff] %v1768
    %1833 = vst [vmem:[#allocation4 + $0xa8] sm:$0xff] %v1769
    %1834 = vst [vmem:[#allocation4 + $0xb0] sm:$0xff] %v1770
    %1835 = vst [vmem:[#allocation4 + $0xb8] sm:$0xff] %v1771
    %1836 = vst [vmem:[#allocation4 + $0xc0] sm:$0xff] %v1772
    %1837 = vst [vmem:[#allocation4 + $0xc8] sm:$0xff] %v1773
    %1838 = vst [vmem:[#allocation4 + $0xd0] sm:$0xff] %v1774
    %1839 = vst [vmem:[#allocation4 + $0xd8] sm:$0xff] %v1775
    %1840 = vst [vmem:[#allocation4 + $0xe0] sm:$0xff] %v1776
    %1841 = vst [vmem:[#allocation4 + $0xe8] sm:$0xff] %v1777
    %1842 = vst [vmem:[#allocation4 + $0xf0] sm:$0xff] %v1778
    %1843 = vst [vmem:[#allocation4 + $0xf8] sm:$0xff] %v1779
    %1844 = vst [vmem:[#allocation4 + $0x100] sm:$0xff] %v1780
    %1845 = vst [vmem:[#allocation4 + $0x108] sm:$0xff] %v1781
    %1846 = vst [vmem:[#allocation4 + $0x110] sm:$0xff] %v1782
    %1847 = vst [vmem:[#allocation4 + $0x118] sm:$0xff] %v1783
    %1848 = vst [vmem:[#allocation4 + $0x120] sm:$0xff] %v1784
    %1849 = vst [vmem:[#allocation4 + $0x128] sm:$0xff] %v1785
    %1850 = vst [vmem:[#allocation4 + $0x130] sm:$0xff] %v1786
    %1851 = vst [vmem:[#allocation4 + $0x138] sm:$0xff] %v1787
    %1852 = vst [vmem:[#allocation4 + $0x140] sm:$0xff] %v1788
    %1853 = vst [vmem:[#allocation4 + $0x148] sm:$0xff] %v1789
    %1854 = vst [vmem:[#allocation4 + $0x150] sm:$0xff] %v1790
    %1855 = vst [vmem:[#allocation4 + $0x158] sm:$0xff] %v1791
    %1856 = vst [vmem:[#allocation4 + $0x160] sm:$0xff] %v1792
    %1857 = vst [vmem:[#allocation4 + $0x168] sm:$0xff] %v1793
    %1858 = vst [vmem:[#allocation4 + $0x170] sm:$0xff] %v1794
    %1859 = vst [vmem:[#allocation4 + $0x178] sm:$0xff] %v1795
    %1860 = vst [vmem:[#allocation4 + $0x180] sm:$0xff] %v1796
    %1861 = vst [vmem:[#allocation4 + $0x188] sm:$0xff] %v1797
    %1862 = vst [vmem:[#allocation4 + $0x190] sm:$0xff] %v1798
    %1863 = vst [vmem:[#allocation4 + $0x198] sm:$0xff] %v1799
    %1864 = vst [vmem:[#allocation4 + $0x1a0] sm:$0xff] %v1800
    %1865 = vst [vmem:[#allocation4 + $0x1a8] sm:$0xff] %v1801
    %1866 = vst [vmem:[#allocation4 + $0x1b0] sm:$0xff] %v1802
    %1867 = vst [vmem:[#allocation4 + $0x1b8] sm:$0xff] %v1803
    %1868 = vst [vmem:[#allocation4 + $0x1c0] sm:$0xff] %v1804
    %1869 = vst [vmem:[#allocation4 + $0x1c8] sm:$0xff] %v1805
    %1870 = vst [vmem:[#allocation4 + $0x1d0] sm:$0xff] %v1806
    %1871 = vst [vmem:[#allocation4 + $0x1d8] sm:$0xff] %v1807
    %1872 = vst [vmem:[#allocation4 + $0x1e0] sm:$0xff] %v1808
    %1873 = vst [vmem:[#allocation4 + $0x1e8] sm:$0xff] %v1809
    %1874 = vst [vmem:[#allocation4 + $0x1f0] sm:$0xff] %v1810
    %1875 = vst [vmem:[#allocation4 + $0x1f8] sm:$0xff] %v1811
    // Predicated region
    $region38: #{tpu_custom_call.1} parent=1 // pred_check
      _
    $region39: #{tpu_custom_call.1} parent=1 // pred_check_branch
      %1877 = sbr.rel (0) target = $region41
    $region40: #{tpu_custom_call.1} parent=1 // pred_region
      %s1879 = ssub.s32 8192, 8192
      %1880 = vsyncadd [#allocation5], %s1879
      %s1881 = sshll.u32 [#allocation4], 4
      %s1882 = int_to_ptr.vmem [resolvable:$true] %s1881
      %1887 = dma.vmem_to_hbm [thread:$0]  %s1882, 8192, %s9, [#allocation5], 128, 128, 8
    $region41: #{tpu_custom_call.1} parent=1 // pred_fallthru
      _
    // Predicated region
    $region42: #{tpu_custom_call.1} parent=1 // pred_check
      _
    $region43: #{tpu_custom_call.1} parent=1 // pred_check_branch
      %1889 = sbr.rel (0) target = $region45
    $region44: #{tpu_custom_call.1} parent=1 // pred_region
      %1890 = dma.done [#allocation5], 8192
    $region45: #{tpu_custom_call.1} parent=1 // pred_fallthru
      _
    %1891 = vsyncpa [#allocation5], 1

</llo_original>
